<compile_context>
chip_gen: v6e
topology: v6e:2x2x1
jax: 0.10.0
libtpu: 0.0.40
codegen_flags: <defaults>
</compile_context>

<pallas_src>
import functools

import jax
import jax.numpy as jnp
from jax.experimental import pallas as pl
from jax.experimental.pallas import tpu as pltpu


def _round_up(v, m):
    return ((v + m - 1) // m) * m


def rnn_seq_kernel(x_ref, h0_ref, w_ref, b_ref, out_ref, hseq_ref, h_carry,
                   *, tt, h_pad):
    """Runs `tt` RNN time steps per grid iteration.

    The hidden state is carried across the unrolled time steps as a vreg
    value; the VMEM scratch `h_carry` only hands it to the next grid step.
    """
    @pl.when(pl.program_id(0) == 0)
    def _():
        h_carry[...] = h0_ref[...]

    h = h_carry[...]                       # (B_pad, H_pad), compute dtype (bf16)
    bias = b_ref[...]                      # (1, N_pad) f32; padded logit lanes = -1e30

    # Static unroll (tt is a small Python int) — equivalent to
    # lax.fori_loop(..., unroll=True): the serial recurrence stays in vregs.
    for t in range(tt):
        comb = jnp.concatenate([x_ref[t], h], axis=1)      # (B_pad, K_pad+H_pad)
        # Single fused i2h|i2o matmul, f32 MXU accumulation.  The weight load
        # stays inside the loop so the compiler streams it from VMEM instead
        # of pinning 32 vregs across the whole unrolled loop.
        z = jnp.dot(comb, w_ref[...],
                    preferred_element_type=jnp.float32) + bias   # (B_pad, N_pad) f32

        new_h = z[:, :h_pad]                               # i2h result (f32)
        logits = z[:, h_pad:]                              # i2o result; pad lanes -1e30

        # LogSoftmax(dim=1): one cross-lane max + one cross-lane sum (XLU).
        m = jnp.max(logits, axis=1, keepdims=True)
        shifted = logits - m
        lse = jnp.log(jnp.sum(jnp.exp(shifted), axis=1, keepdims=True))

        out_ref[t] = (shifted - lse).astype(out_ref.dtype)
        h = new_h.astype(h_carry.dtype)                    # bf16 carry (next matmul input)
        hseq_ref[t] = h.astype(hseq_ref.dtype)

    h_carry[...] = h


def rnn_sequence_forward(x_seq, h0, w_i2h, b_i2h, w_i2o, b_i2o,
                         *, compute_dtype=jnp.bfloat16, time_block=16):
    """Apply the RNN cell over a whole sequence in ONE pallas_call.

    x_seq:  (T, B, input_size) float32
    h0:     (B, hidden_size)   float32
    w_i2h:  (hidden_size, input_size + hidden_size)   (nn.Linear layout: out, in)
    b_i2h:  (hidden_size,)
    w_i2o:  (output_size, input_size + hidden_size)
    b_i2o:  (output_size,)
    Returns (log_probs (T, B, output_size), hidden_seq (T, B, hidden_size)) in f32.
    """
    T, B, input_size = x_seq.shape
    hidden_size = w_i2h.shape[0]
    output_size = w_i2o.shape[0]
    assert w_i2h.shape[1] == input_size + hidden_size
    assert w_i2o.shape[1] == input_size + hidden_size

    # (8,128)-friendly padded sizes.
    # TODO(synk): pack many names per call (B_pad -> 128-256) to convert this
    # from latency-bound to real MXU work; the time axis must stay serial.
    B_pad = max(8, _round_up(B, 8))
    K_pad = _round_up(input_size, 128)
    H_pad = _round_up(hidden_size, 128)
    O_pad = _round_up(output_size, 128)
    KH_pad = K_pad + H_pad
    N_pad = H_pad + O_pad

    tt = min(time_block, T)            # time steps per grid iteration
    T_pad = _round_up(T, tt)

    def pad2(a, rows, cols):
        return jnp.pad(a, ((0, rows - a.shape[0]), (0, cols - a.shape[1])))

    # nn.Linear layout is (out, in); combined = [x | h], so split in-features
    # into x-rows / h-rows, transpose to (in, out), fuse i2h|i2o column-wise.
    top = jnp.concatenate([pad2(w_i2h[:, :input_size].T, K_pad, H_pad),
                           pad2(w_i2o[:, :input_size].T, K_pad, O_pad)], axis=1)
    bot = jnp.concatenate([pad2(w_i2h[:, input_size:].T, H_pad, H_pad),
                           pad2(w_i2o[:, input_size:].T, H_pad, O_pad)], axis=1)
    w = jnp.concatenate([top, bot], axis=0).astype(compute_dtype)   # (KH_pad, N_pad)

    # Bias stays f32 (-1e30 would overflow bf16 on purpose-built masks); padded
    # logit lanes carry the mask so the kernel needs no iota/where.
    bias = jnp.concatenate([
        jnp.pad(b_i2h.astype(jnp.float32), (0, H_pad - hidden_size)),
        jnp.pad(b_i2o.astype(jnp.float32), (0, O_pad - output_size),
                constant_values=-1e30),
    ])[None, :]                                                      # (1, N_pad) f32

    x_p = jnp.pad(x_seq, ((0, T_pad - T), (0, B_pad - B),
                          (0, K_pad - input_size))).astype(compute_dtype)
    h0_p = jnp.pad(h0, ((0, B_pad - B), (0, H_pad - hidden_size))
                   ).astype(compute_dtype)

    kernel = functools.partial(rnn_seq_kernel, tt=tt, h_pad=H_pad)

    # VMEM budget: x block (tt*B_pad*K_pad*2B) + two bf16 output blocks
    # (tt*B_pad*128*2B each), all double-buffered, + 128 KiB resident weights
    # -> well under the 32 MiB scoped default on every generation (and v7x's
    # 64 MiB physical VMEM).
    # TODO(synk): for large batched inference add a leading "parallel" batch
    # grid axis (dimension_semantics=("parallel", "arbitrary")) so v7x's
    # second TensorCore is used.
    out_p, h_seq_p = pl.pallas_call(
        kernel,
        out_shape=(
            jax.ShapeDtypeStruct((T_pad, B_pad, O_pad), compute_dtype),
            jax.ShapeDtypeStruct((T_pad, B_pad, H_pad), compute_dtype),
        ),
        grid_spec=pltpu.PrefetchScalarGridSpec(
            num_scalar_prefetch=0,
            grid=(T_pad // tt,),
            in_specs=[
                pl.BlockSpec((tt, B_pad, K_pad), lambda g: (g, 0, 0)),  # x time-block
                pl.BlockSpec((B_pad, H_pad), lambda g: (0, 0)),         # h0 (resident)
                pl.BlockSpec((KH_pad, N_pad), lambda g: (0, 0)),        # fused W (resident)
                pl.BlockSpec((1, N_pad), lambda g: (0, 0)),             # fused bias+mask
            ],
            out_specs=(
                pl.BlockSpec((tt, B_pad, O_pad), lambda g: (g, 0, 0)),  # log-probs
                pl.BlockSpec((tt, B_pad, H_pad), lambda g: (g, 0, 0)),  # hidden seq
            ),
            scratch_shapes=[pltpu.VMEM((B_pad, H_pad), compute_dtype)], # cross-block carry
        ),
        compiler_params=pltpu.CompilerParams(
            dimension_semantics=("arbitrary",),   # serial recurrence over time blocks
        ),
    )(x_p, h0_p, w, bias)

    out = out_p[:T, :B, :output_size].astype(jnp.float32)
    h_seq = h_seq_p[:T, :B, :hidden_size].astype(jnp.float32)
    return out, h_seq


def rnn_forward(x, h, w_i2h, b_i2h, w_i2o, b_i2o, *, compute_dtype=jnp.bfloat16):
    """Single-step forward matching RNN.forward(input, hidden)."""
    out_seq, h_seq = rnn_sequence_forward(x[None], h, w_i2h, b_i2h, w_i2o, b_i2o,
                                          compute_dtype=compute_dtype)
    return out_seq[0], h_seq[0]


if __name__ == "__main__":
    # Small deterministic config consistent with the module (a "name" of T letters).
    T = 8
    batch = 2
    input_size = 16
    hidden_size = 32
    output_size = 8

    key = jax.random.PRNGKey(0)
    k1, k3, k4, k5, k6 = jax.random.split(key, 5)

    x_seq = jax.random.normal(k1, (T, batch, input_size), jnp.float32)
    h0 = jnp.zeros((batch, hidden_size), jnp.float32)          # initHidden
    comb = input_size + hidden_size
    # nn.Linear layout: (out_features, in_features)
    w_i2h = jax.random.normal(k3, (hidden_size, comb), jnp.float32) * 0.1
    b_i2h = jax.random.normal(k4, (hidden_size,), jnp.float32) * 0.1
    w_i2o = jax.random.normal(k5, (output_size, comb), jnp.float32) * 0.1
    b_i2o = jax.random.normal(k6, (output_size,), jnp.float32) * 0.1

    out_seq, h_seq = rnn_sequence_forward(x_seq, h0, w_i2h, b_i2h, w_i2o, b_i2o)
    jax.block_until_ready((out_seq, h_seq))

    # Pure-JAX step-by-step reference mirroring the kernel's numerics: bf16
    # matmul operands, f32 accumulation, bf16-carried hidden state.
    cd = jnp.bfloat16
    wxh = w_i2h[:, :input_size].T.astype(cd)
    whh = w_i2h[:, input_size:].T.astype(cd)
    wxo = w_i2o[:, :input_size].T.astype(cd)
    who = w_i2o[:, input_size:].T.astype(cd)
    h_bf = h0.astype(cd)
    ref_out, ref_h = [], []
    for t in range(T):
        xt = x_seq[t].astype(cd)
        new_h = (jnp.dot(xt, wxh, preferred_element_type=jnp.float32)
                 + jnp.dot(h_bf, whh, preferred_element_type=jnp.float32) + b_i2h)
        logits = (jnp.dot(xt, wxo, preferred_element_type=jnp.float32)
                  + jnp.dot(h_bf, who, preferred_element_type=jnp.float32) + b_i2o)
        ref_out.append(jax.nn.log_softmax(logits, axis=1))
        ref_h.append(new_h)
        h_bf = new_h.astype(cd)
    ref_out = jnp.stack(ref_out)
    ref_h = jnp.stack(ref_h)

    # Remaining error vs. the f32 reference is the bf16 output quantization.
    assert jnp.allclose(out_seq, ref_out, atol=2e-2, rtol=2e-2), (
        float(jnp.max(jnp.abs(out_seq - ref_out))))
    assert jnp.allclose(h_seq, ref_h, atol=2e-2, rtol=2e-2), (
        float(jnp.max(jnp.abs(h_seq - ref_h))))

    # Single-step API matches the module's forward(input, hidden) signature.
    out1, h1 = rnn_forward(x_seq[0], h0, w_i2h, b_i2h, w_i2o, b_i2o)
    jax.block_until_ready((out1, h1))
    assert jnp.allclose(out1, ref_out[0], atol=2e-2, rtol=2e-2)
    assert jnp.allclose(h1, ref_h[0], atol=2e-2, rtol=2e-2)

    print("KERNEL_OK")
</pallas_src>

<mosaic_0001>
module attributes {stable_mosaic.version = 11 : i64} {
  func.func @rnn_seq_kernel(%arg0: i32, %arg1: memref<8x8x128xbf16, #tpu.memory_space<vmem>>, %arg2: memref<8x128xbf16, #tpu.memory_space<vmem>>, %arg3: memref<256x256xbf16, #tpu.memory_space<vmem>>, %arg4: memref<1x256xf32, #tpu.memory_space<vmem>>, %arg5: memref<8x8x128xbf16, #tpu.memory_space<vmem>>, %arg6: memref<8x8x128xbf16, #tpu.memory_space<vmem>>, %arg7: memref<8x128xbf16, #tpu.memory_space<vmem>>) attributes {dimension_semantics = [#tpu.dimension_semantics<arbitrary>], iteration_bounds = array<i64: 1>, scalar_prefetch = 0 : i64, scratch_operands = 1 : i64, tpu.core_type = #tpu.core_type<tc>, window_params = [{transform_indices = @transform_0, window_bounds = array<i64: 8, 8, 128>}, {pipeline_mode = #tpu.pipeline_mode<synchronous>, transform_indices = @transform_1, window_bounds = array<i64: 8, 128>}, {pipeline_mode = #tpu.pipeline_mode<synchronous>, transform_indices = @transform_2, window_bounds = array<i64: 256, 256>}, {pipeline_mode = #tpu.pipeline_mode<synchronous>, transform_indices = @transform_3, window_bounds = array<i64: 1, 256>}, {transform_indices = @transform_4, window_bounds = array<i64: 8, 8, 128>}, {transform_indices = @transform_5, window_bounds = array<i64: 8, 8, 128>}]} {
    %c0_i32 = arith.constant 0 : i32
    %0 = arith.cmpi eq, %arg0, %c0_i32 : i32
    %1 = arith.extui %0 : i1 to i32
    %c0_i32_0 = arith.constant 0 : i32
    %2 = arith.cmpi ne, %1, %c0_i32_0 : i32
    scf.if %2 {
      %c0_110 = arith.constant 0 : index
      %c0_111 = arith.constant 0 : index
      %222 = vector.load %arg2[%c0_110, %c0_111] : memref<8x128xbf16, #tpu.memory_space<vmem>>, vector<8x128xbf16>
      %c0_112 = arith.constant 0 : index
      %c0_113 = arith.constant 0 : index
      %223 = vector.load %arg7[%c0_112, %c0_113] : memref<8x128xbf16, #tpu.memory_space<vmem>>, vector<8x128xbf16>
      tpu.vector_store %arg7[%c0_112, %c0_113], %222 {strides = array<i32>} : memref<8x128xbf16, #tpu.memory_space<vmem>>, vector<8x128xbf16>,
    } else {
    }
    %c0 = arith.constant 0 : index
    %c0_1 = arith.constant 0 : index
    %3 = vector.load %arg7[%c0, %c0_1] : memref<8x128xbf16, #tpu.memory_space<vmem>>, vector<8x128xbf16>
    %c0_2 = arith.constant 0 : index
    %c0_3 = arith.constant 0 : index
    %4 = vector.load %arg4[%c0_2, %c0_3] : memref<1x256xf32, #tpu.memory_space<vmem>>, vector<1x256xf32>
    %c0_4 = arith.constant 0 : index
    %c0_5 = arith.constant 0 : index
    %c0_6 = arith.constant 0 : index
    %5 = vector.load %arg1[%c0_4, %c0_5, %c0_6] : memref<8x8x128xbf16, #tpu.memory_space<vmem>>, vector<1x8x128xbf16>
    %6 = vector.shape_cast %5 : vector<1x8x128xbf16> to vector<8x128xbf16>
    %7 = tpu.concatenate %6, %3 in 1 : vector<8x128xbf16>, vector<8x128xbf16> -> vector<8x256xbf16>
    %c0_7 = arith.constant 0 : index
    %c0_8 = arith.constant 0 : index
    %8 = vector.load %arg3[%c0_7, %c0_8] : memref<256x256xbf16, #tpu.memory_space<vmem>>, vector<256x256xbf16>
    %cst = arith.constant dense<0.000000e+00> : vector<8x256xf32>
    %9 = tpu.matmul %7, %8, %cst {dimension_numbers = #tpu.dot_dimension_numbers<[1], [0], [0], [1], [0, 0, 1, 1], [], []>} : vector<8x256xbf16>, vector<256x256xbf16>, vector<8x256xf32> -> vector<8x256xf32>
    %10 = vector.broadcast %4 : vector<1x256xf32> to vector<8x256xf32>
    %11 = arith.addf %9, %10 : vector<8x256xf32>
    %12 = vector.extract_strided_slice %11 {offsets = [0, 0], sizes = [8, 128], strides = [1, 1]} : vector<8x256xf32> to vector<8x128xf32>
    %13 = vector.extract_strided_slice %11 {offsets = [0, 128], sizes = [8, 128], strides = [1, 1]} : vector<8x256xf32> to vector<8x128xf32>
    %cst_9 = arith.constant dense<0xFF800000> : vector<8xf32>
    %14 = vector.multi_reduction <maximumf>, %13, %cst_9 [1] : vector<8x128xf32> to vector<8xf32>
    %15 = vector.shape_cast %14 : vector<8xf32> to vector<8x1xf32>
    %16 = vector.broadcast %15 : vector<8x1xf32> to vector<8x128xf32>
    %17 = arith.subf %13, %16 : vector<8x128xf32>
    %18 = math.exp %17 : vector<8x128xf32>
    %cst_10 = arith.constant dense<0.000000e+00> : vector<8xf32>
    %19 = vector.multi_reduction <add>, %18, %cst_10 [1] : vector<8x128xf32> to vector<8xf32>
    %20 = vector.shape_cast %19 : vector<8xf32> to vector<8x1xf32>
    %21 = math.log %20 : vector<8x1xf32>
    %22 = vector.broadcast %21 : vector<8x1xf32> to vector<8x128xf32>
    %23 = arith.subf %17, %22 : vector<8x128xf32>
    %24 = arith.truncf %23 : vector<8x128xf32> to vector<8x128xbf16>
    %c0_11 = arith.constant 0 : index
    %c0_12 = arith.constant 0 : index
    %c0_13 = arith.constant 0 : index
    %25 = vector.load %arg5[%c0_11, %c0_12, %c0_13] : memref<8x8x128xbf16, #tpu.memory_space<vmem>>, vector<1x8x128xbf16>
    %26 = vector.shape_cast %25 : vector<1x8x128xbf16> to vector<8x128xbf16>
    %27 = vector.shape_cast %24 : vector<8x128xbf16> to vector<1x8x128xbf16>
    tpu.vector_store %arg5[%c0_11, %c0_12, %c0_13], %27 {strides = array<i32>} : memref<8x8x128xbf16, #tpu.memory_space<vmem>>, vector<1x8x128xbf16>,
    %28 = arith.truncf %12 : vector<8x128xf32> to vector<8x128xbf16>
    %c0_14 = arith.constant 0 : index
    %c0_15 = arith.constant 0 : index
    %c0_16 = arith.constant 0 : index
    %29 = vector.load %arg6[%c0_14, %c0_15, %c0_16] : memref<8x8x128xbf16, #tpu.memory_space<vmem>>, vector<1x8x128xbf16>
    %30 = vector.shape_cast %29 : vector<1x8x128xbf16> to vector<8x128xbf16>
    %31 = vector.shape_cast %28 : vector<8x128xbf16> to vector<1x8x128xbf16>
    tpu.vector_store %arg6[%c0_14, %c0_15, %c0_16], %31 {strides = array<i32>} : memref<8x8x128xbf16, #tpu.memory_space<vmem>>, vector<1x8x128xbf16>,
    %c1 = arith.constant 1 : index
    %c0_17 = arith.constant 0 : index
    %c0_18 = arith.constant 0 : index
    %32 = vector.load %arg1[%c1, %c0_17, %c0_18] : memref<8x8x128xbf16, #tpu.memory_space<vmem>>, vector<1x8x128xbf16>
    %33 = vector.shape_cast %32 : vector<1x8x128xbf16> to vector<8x128xbf16>
    %34 = tpu.concatenate %33, %28 in 1 : vector<8x128xbf16>, vector<8x128xbf16> -> vector<8x256xbf16>
    %c0_19 = arith.constant 0 : index
    %c0_20 = arith.constant 0 : index
    %35 = vector.load %arg3[%c0_19, %c0_20] : memref<256x256xbf16, #tpu.memory_space<vmem>>, vector<256x256xbf16>
    %cst_21 = arith.constant dense<0.000000e+00> : vector<8x256xf32>
    %36 = tpu.matmul %34, %35, %cst_21 {dimension_numbers = #tpu.dot_dimension_numbers<[1], [0], [0], [1], [0, 0, 1, 1], [], []>} : vector<8x256xbf16>, vector<256x256xbf16>, vector<8x256xf32> -> vector<8x256xf32>
    %37 = vector.broadcast %4 : vector<1x256xf32> to vector<8x256xf32>
    %38 = arith.addf %36, %37 : vector<8x256xf32>
    %39 = vector.extract_strided_slice %38 {offsets = [0, 0], sizes = [8, 128], strides = [1, 1]} : vector<8x256xf32> to vector<8x128xf32>
    %40 = vector.extract_strided_slice %38 {offsets = [0, 128], sizes = [8, 128], strides = [1, 1]} : vector<8x256xf32> to vector<8x128xf32>
    %cst_22 = arith.constant dense<0xFF800000> : vector<8xf32>
    %41 = vector.multi_reduction <maximumf>, %40, %cst_22 [1] : vector<8x128xf32> to vector<8xf32>
    %42 = vector.shape_cast %41 : vector<8xf32> to vector<8x1xf32>
    %43 = vector.broadcast %42 : vector<8x1xf32> to vector<8x128xf32>
    %44 = arith.subf %40, %43 : vector<8x128xf32>
    %45 = math.exp %44 : vector<8x128xf32>
    %cst_23 = arith.constant dense<0.000000e+00> : vector<8xf32>
    %46 = vector.multi_reduction <add>, %45, %cst_23 [1] : vector<8x128xf32> to vector<8xf32>
    %47 = vector.shape_cast %46 : vector<8xf32> to vector<8x1xf32>
    %48 = math.log %47 : vector<8x1xf32>
    %49 = vector.broadcast %48 : vector<8x1xf32> to vector<8x128xf32>
    %50 = arith.subf %44, %49 : vector<8x128xf32>
    %51 = arith.truncf %50 : vector<8x128xf32> to vector<8x128xbf16>
    %c1_24 = arith.constant 1 : index
    %c0_25 = arith.constant 0 : index
    %c0_26 = arith.constant 0 : index
    %52 = vector.load %arg5[%c1_24, %c0_25, %c0_26] : memref<8x8x128xbf16, #tpu.memory_space<vmem>>, vector<1x8x128xbf16>
    %53 = vector.shape_cast %52 : vector<1x8x128xbf16> to vector<8x128xbf16>
    %54 = vector.shape_cast %51 : vector<8x128xbf16> to vector<1x8x128xbf16>
    tpu.vector_store %arg5[%c1_24, %c0_25, %c0_26], %54 {strides = array<i32>} : memref<8x8x128xbf16, #tpu.memory_space<vmem>>, vector<1x8x128xbf16>,
    %55 = arith.truncf %39 : vector<8x128xf32> to vector<8x128xbf16>
    %c1_27 = arith.constant 1 : index
    %c0_28 = arith.constant 0 : index
    %c0_29 = arith.constant 0 : index
    %56 = vector.load %arg6[%c1_27, %c0_28, %c0_29] : memref<8x8x128xbf16, #tpu.memory_space<vmem>>, vector<1x8x128xbf16>
    %57 = vector.shape_cast %56 : vector<1x8x128xbf16> to vector<8x128xbf16>
    %58 = vector.shape_cast %55 : vector<8x128xbf16> to vector<1x8x128xbf16>
    tpu.vector_store %arg6[%c1_27, %c0_28, %c0_29], %58 {strides = array<i32>} : memref<8x8x128xbf16, #tpu.memory_space<vmem>>, vector<1x8x128xbf16>,
    %c2 = arith.constant 2 : index
    %c0_30 = arith.constant 0 : index
    %c0_31 = arith.constant 0 : index
    %59 = vector.load %arg1[%c2, %c0_30, %c0_31] : memref<8x8x128xbf16, #tpu.memory_space<vmem>>, vector<1x8x128xbf16>
    %60 = vector.shape_cast %59 : vector<1x8x128xbf16> to vector<8x128xbf16>
    %61 = tpu.concatenate %60, %55 in 1 : vector<8x128xbf16>, vector<8x128xbf16> -> vector<8x256xbf16>
    %c0_32 = arith.constant 0 : index
    %c0_33 = arith.constant 0 : index
    %62 = vector.load %arg3[%c0_32, %c0_33] : memref<256x256xbf16, #tpu.memory_space<vmem>>, vector<256x256xbf16>
    %cst_34 = arith.constant dense<0.000000e+00> : vector<8x256xf32>
    %63 = tpu.matmul %61, %62, %cst_34 {dimension_numbers = #tpu.dot_dimension_numbers<[1], [0], [0], [1], [0, 0, 1, 1], [], []>} : vector<8x256xbf16>, vector<256x256xbf16>, vector<8x256xf32> -> vector<8x256xf32>
    %64 = vector.broadcast %4 : vector<1x256xf32> to vector<8x256xf32>
    %65 = arith.addf %63, %64 : vector<8x256xf32>
    %66 = vector.extract_strided_slice %65 {offsets = [0, 0], sizes = [8, 128], strides = [1, 1]} : vector<8x256xf32> to vector<8x128xf32>
    %67 = vector.extract_strided_slice %65 {offsets = [0, 128], sizes = [8, 128], strides = [1, 1]} : vector<8x256xf32> to vector<8x128xf32>
    %cst_35 = arith.constant dense<0xFF800000> : vector<8xf32>
    %68 = vector.multi_reduction <maximumf>, %67, %cst_35 [1] : vector<8x128xf32> to vector<8xf32>
    %69 = vector.shape_cast %68 : vector<8xf32> to vector<8x1xf32>
    %70 = vector.broadcast %69 : vector<8x1xf32> to vector<8x128xf32>
    %71 = arith.subf %67, %70 : vector<8x128xf32>
    %72 = math.exp %71 : vector<8x128xf32>
    %cst_36 = arith.constant dense<0.000000e+00> : vector<8xf32>
    %73 = vector.multi_reduction <add>, %72, %cst_36 [1] : vector<8x128xf32> to vector<8xf32>
    %74 = vector.shape_cast %73 : vector<8xf32> to vector<8x1xf32>
    %75 = math.log %74 : vector<8x1xf32>
    %76 = vector.broadcast %75 : vector<8x1xf32> to vector<8x128xf32>
    %77 = arith.subf %71, %76 : vector<8x128xf32>
    %78 = arith.truncf %77 : vector<8x128xf32> to vector<8x128xbf16>
    %c2_37 = arith.constant 2 : index
    %c0_38 = arith.constant 0 : index
    %c0_39 = arith.constant 0 : index
    %79 = vector.load %arg5[%c2_37, %c0_38, %c0_39] : memref<8x8x128xbf16, #tpu.memory_space<vmem>>, vector<1x8x128xbf16>
    %80 = vector.shape_cast %79 : vector<1x8x128xbf16> to vector<8x128xbf16>
    %81 = vector.shape_cast %78 : vector<8x128xbf16> to vector<1x8x128xbf16>
    tpu.vector_store %arg5[%c2_37, %c0_38, %c0_39], %81 {strides = array<i32>} : memref<8x8x128xbf16, #tpu.memory_space<vmem>>, vector<1x8x128xbf16>,
    %82 = arith.truncf %66 : vector<8x128xf32> to vector<8x128xbf16>
    %c2_40 = arith.constant 2 : index
    %c0_41 = arith.constant 0 : index
    %c0_42 = arith.constant 0 : index
    %83 = vector.load %arg6[%c2_40, %c0_41, %c0_42] : memref<8x8x128xbf16, #tpu.memory_space<vmem>>, vector<1x8x128xbf16>
    %84 = vector.shape_cast %83 : vector<1x8x128xbf16> to vector<8x128xbf16>
    %85 = vector.shape_cast %82 : vector<8x128xbf16> to vector<1x8x128xbf16>
    tpu.vector_store %arg6[%c2_40, %c0_41, %c0_42], %85 {strides = array<i32>} : memref<8x8x128xbf16, #tpu.memory_space<vmem>>, vector<1x8x128xbf16>,
    %c3 = arith.constant 3 : index
    %c0_43 = arith.constant 0 : index
    %c0_44 = arith.constant 0 : index
    %86 = vector.load %arg1[%c3, %c0_43, %c0_44] : memref<8x8x128xbf16, #tpu.memory_space<vmem>>, vector<1x8x128xbf16>
    %87 = vector.shape_cast %86 : vector<1x8x128xbf16> to vector<8x128xbf16>
    %88 = tpu.concatenate %87, %82 in 1 : vector<8x128xbf16>, vector<8x128xbf16> -> vector<8x256xbf16>
    %c0_45 = arith.constant 0 : index
    %c0_46 = arith.constant 0 : index
    %89 = vector.load %arg3[%c0_45, %c0_46] : memref<256x256xbf16, #tpu.memory_space<vmem>>, vector<256x256xbf16>
    %cst_47 = arith.constant dense<0.000000e+00> : vector<8x256xf32>
    %90 = tpu.matmul %88, %89, %cst_47 {dimension_numbers = #tpu.dot_dimension_numbers<[1], [0], [0], [1], [0, 0, 1, 1], [], []>} : vector<8x256xbf16>, vector<256x256xbf16>, vector<8x256xf32> -> vector<8x256xf32>
    %91 = vector.broadcast %4 : vector<1x256xf32> to vector<8x256xf32>
    %92 = arith.addf %90, %91 : vector<8x256xf32>
    %93 = vector.extract_strided_slice %92 {offsets = [0, 0], sizes = [8, 128], strides = [1, 1]} : vector<8x256xf32> to vector<8x128xf32>
    %94 = vector.extract_strided_slice %92 {offsets = [0, 128], sizes = [8, 128], strides = [1, 1]} : vector<8x256xf32> to vector<8x128xf32>
    %cst_48 = arith.constant dense<0xFF800000> : vector<8xf32>
    %95 = vector.multi_reduction <maximumf>, %94, %cst_48 [1] : vector<8x128xf32> to vector<8xf32>
    %96 = vector.shape_cast %95 : vector<8xf32> to vector<8x1xf32>
    %97 = vector.broadcast %96 : vector<8x1xf32> to vector<8x128xf32>
    %98 = arith.subf %94, %97 : vector<8x128xf32>
    %99 = math.exp %98 : vector<8x128xf32>
    %cst_49 = arith.constant dense<0.000000e+00> : vector<8xf32>
    %100 = vector.multi_reduction <add>, %99, %cst_49 [1] : vector<8x128xf32> to vector<8xf32>
    %101 = vector.shape_cast %100 : vector<8xf32> to vector<8x1xf32>
    %102 = math.log %101 : vector<8x1xf32>
    %103 = vector.broadcast %102 : vector<8x1xf32> to vector<8x128xf32>
    %104 = arith.subf %98, %103 : vector<8x128xf32>
    %105 = arith.truncf %104 : vector<8x128xf32> to vector<8x128xbf16>
    %c3_50 = arith.constant 3 : index
    %c0_51 = arith.constant 0 : index
    %c0_52 = arith.constant 0 : index
    %106 = vector.load %arg5[%c3_50, %c0_51, %c0_52] : memref<8x8x128xbf16, #tpu.memory_space<vmem>>, vector<1x8x128xbf16>
    %107 = vector.shape_cast %106 : vector<1x8x128xbf16> to vector<8x128xbf16>
    %108 = vector.shape_cast %105 : vector<8x128xbf16> to vector<1x8x128xbf16>
    tpu.vector_store %arg5[%c3_50, %c0_51, %c0_52], %108 {strides = array<i32>} : memref<8x8x128xbf16, #tpu.memory_space<vmem>>, vector<1x8x128xbf16>,
    %109 = arith.truncf %93 : vector<8x128xf32> to vector<8x128xbf16>
    %c3_53 = arith.constant 3 : index
    %c0_54 = arith.constant 0 : index
    %c0_55 = arith.constant 0 : index
    %110 = vector.load %arg6[%c3_53, %c0_54, %c0_55] : memref<8x8x128xbf16, #tpu.memory_space<vmem>>, vector<1x8x128xbf16>
    %111 = vector.shape_cast %110 : vector<1x8x128xbf16> to vector<8x128xbf16>
    %112 = vector.shape_cast %109 : vector<8x128xbf16> to vector<1x8x128xbf16>
    tpu.vector_store %arg6[%c3_53, %c0_54, %c0_55], %112 {strides = array<i32>} : memref<8x8x128xbf16, #tpu.memory_space<vmem>>, vector<1x8x128xbf16>,
    %c4 = arith.constant 4 : index
    %c0_56 = arith.constant 0 : index
    %c0_57 = arith.constant 0 : index
    %113 = vector.load %arg1[%c4, %c0_56, %c0_57] : memref<8x8x128xbf16, #tpu.memory_space<vmem>>, vector<1x8x128xbf16>
    %114 = vector.shape_cast %113 : vector<1x8x128xbf16> to vector<8x128xbf16>
    %115 = tpu.concatenate %114, %109 in 1 : vector<8x128xbf16>, vector<8x128xbf16> -> vector<8x256xbf16>
    %c0_58 = arith.constant 0 : index
    %c0_59 = arith.constant 0 : index
    %116 = vector.load %arg3[%c0_58, %c0_59] : memref<256x256xbf16, #tpu.memory_space<vmem>>, vector<256x256xbf16>
    %cst_60 = arith.constant dense<0.000000e+00> : vector<8x256xf32>
    %117 = tpu.matmul %115, %116, %cst_60 {dimension_numbers = #tpu.dot_dimension_numbers<[1], [0], [0], [1], [0, 0, 1, 1], [], []>} : vector<8x256xbf16>, vector<256x256xbf16>, vector<8x256xf32> -> vector<8x256xf32>
    %118 = vector.broadcast %4 : vector<1x256xf32> to vector<8x256xf32>
    %119 = arith.addf %117, %118 : vector<8x256xf32>
    %120 = vector.extract_strided_slice %119 {offsets = [0, 0], sizes = [8, 128], strides = [1, 1]} : vector<8x256xf32> to vector<8x128xf32>
    %121 = vector.extract_strided_slice %119 {offsets = [0, 128], sizes = [8, 128], strides = [1, 1]} : vector<8x256xf32> to vector<8x128xf32>
    %cst_61 = arith.constant dense<0xFF800000> : vector<8xf32>
    %122 = vector.multi_reduction <maximumf>, %121, %cst_61 [1] : vector<8x128xf32> to vector<8xf32>
    %123 = vector.shape_cast %122 : vector<8xf32> to vector<8x1xf32>
    %124 = vector.broadcast %123 : vector<8x1xf32> to vector<8x128xf32>
    %125 = arith.subf %121, %124 : vector<8x128xf32>
    %126 = math.exp %125 : vector<8x128xf32>
    %cst_62 = arith.constant dense<0.000000e+00> : vector<8xf32>
    %127 = vector.multi_reduction <add>, %126, %cst_62 [1] : vector<8x128xf32> to vector<8xf32>
    %128 = vector.shape_cast %127 : vector<8xf32> to vector<8x1xf32>
    %129 = math.log %128 : vector<8x1xf32>
    %130 = vector.broadcast %129 : vector<8x1xf32> to vector<8x128xf32>
    %131 = arith.subf %125, %130 : vector<8x128xf32>
    %132 = arith.truncf %131 : vector<8x128xf32> to vector<8x128xbf16>
    %c4_63 = arith.constant 4 : index
    %c0_64 = arith.constant 0 : index
    %c0_65 = arith.constant 0 : index
    %133 = vector.load %arg5[%c4_63, %c0_64, %c0_65] : memref<8x8x128xbf16, #tpu.memory_space<vmem>>, vector<1x8x128xbf16>
    %134 = vector.shape_cast %133 : vector<1x8x128xbf16> to vector<8x128xbf16>
    %135 = vector.shape_cast %132 : vector<8x128xbf16> to vector<1x8x128xbf16>
    tpu.vector_store %arg5[%c4_63, %c0_64, %c0_65], %135 {strides = array<i32>} : memref<8x8x128xbf16, #tpu.memory_space<vmem>>, vector<1x8x128xbf16>,
    %136 = arith.truncf %120 : vector<8x128xf32> to vector<8x128xbf16>
    %c4_66 = arith.constant 4 : index
    %c0_67 = arith.constant 0 : index
    %c0_68 = arith.constant 0 : index
    %137 = vector.load %arg6[%c4_66, %c0_67, %c0_68] : memref<8x8x128xbf16, #tpu.memory_space<vmem>>, vector<1x8x128xbf16>
    %138 = vector.shape_cast %137 : vector<1x8x128xbf16> to vector<8x128xbf16>
    %139 = vector.shape_cast %136 : vector<8x128xbf16> to vector<1x8x128xbf16>
    tpu.vector_store %arg6[%c4_66, %c0_67, %c0_68], %139 {strides = array<i32>} : memref<8x8x128xbf16, #tpu.memory_space<vmem>>, vector<1x8x128xbf16>,
    %c5 = arith.constant 5 : index
    %c0_69 = arith.constant 0 : index
    %c0_70 = arith.constant 0 : index
    %140 = vector.load %arg1[%c5, %c0_69, %c0_70] : memref<8x8x128xbf16, #tpu.memory_space<vmem>>, vector<1x8x128xbf16>
    %141 = vector.shape_cast %140 : vector<1x8x128xbf16> to vector<8x128xbf16>
    %142 = tpu.concatenate %141, %136 in 1 : vector<8x128xbf16>, vector<8x128xbf16> -> vector<8x256xbf16>
    %c0_71 = arith.constant 0 : index
    %c0_72 = arith.constant 0 : index
    %143 = vector.load %arg3[%c0_71, %c0_72] : memref<256x256xbf16, #tpu.memory_space<vmem>>, vector<256x256xbf16>
    %cst_73 = arith.constant dense<0.000000e+00> : vector<8x256xf32>
    %144 = tpu.matmul %142, %143, %cst_73 {dimension_numbers = #tpu.dot_dimension_numbers<[1], [0], [0], [1], [0, 0, 1, 1], [], []>} : vector<8x256xbf16>, vector<256x256xbf16>, vector<8x256xf32> -> vector<8x256xf32>
    %145 = vector.broadcast %4 : vector<1x256xf32> to vector<8x256xf32>
    %146 = arith.addf %144, %145 : vector<8x256xf32>
    %147 = vector.extract_strided_slice %146 {offsets = [0, 0], sizes = [8, 128], strides = [1, 1]} : vector<8x256xf32> to vector<8x128xf32>
    %148 = vector.extract_strided_slice %146 {offsets = [0, 128], sizes = [8, 128], strides = [1, 1]} : vector<8x256xf32> to vector<8x128xf32>
    %cst_74 = arith.constant dense<0xFF800000> : vector<8xf32>
    %149 = vector.multi_reduction <maximumf>, %148, %cst_74 [1] : vector<8x128xf32> to vector<8xf32>
    %150 = vector.shape_cast %149 : vector<8xf32> to vector<8x1xf32>
    %151 = vector.broadcast %150 : vector<8x1xf32> to vector<8x128xf32>
    %152 = arith.subf %148, %151 : vector<8x128xf32>
    %153 = math.exp %152 : vector<8x128xf32>
    %cst_75 = arith.constant dense<0.000000e+00> : vector<8xf32>
    %154 = vector.multi_reduction <add>, %153, %cst_75 [1] : vector<8x128xf32> to vector<8xf32>
    %155 = vector.shape_cast %154 : vector<8xf32> to vector<8x1xf32>
    %156 = math.log %155 : vector<8x1xf32>
    %157 = vector.broadcast %156 : vector<8x1xf32> to vector<8x128xf32>
    %158 = arith.subf %152, %157 : vector<8x128xf32>
    %159 = arith.truncf %158 : vector<8x128xf32> to vector<8x128xbf16>
    %c5_76 = arith.constant 5 : index
    %c0_77 = arith.constant 0 : index
    %c0_78 = arith.constant 0 : index
    %160 = vector.load %arg5[%c5_76, %c0_77, %c0_78] : memref<8x8x128xbf16, #tpu.memory_space<vmem>>, vector<1x8x128xbf16>
    %161 = vector.shape_cast %160 : vector<1x8x128xbf16> to vector<8x128xbf16>
    %162 = vector.shape_cast %159 : vector<8x128xbf16> to vector<1x8x128xbf16>
    tpu.vector_store %arg5[%c5_76, %c0_77, %c0_78], %162 {strides = array<i32>} : memref<8x8x128xbf16, #tpu.memory_space<vmem>>, vector<1x8x128xbf16>,
    %163 = arith.truncf %147 : vector<8x128xf32> to vector<8x128xbf16>
    %c5_79 = arith.constant 5 : index
    %c0_80 = arith.constant 0 : index
    %c0_81 = arith.constant 0 : index
    %164 = vector.load %arg6[%c5_79, %c0_80, %c0_81] : memref<8x8x128xbf16, #tpu.memory_space<vmem>>, vector<1x8x128xbf16>
    %165 = vector.shape_cast %164 : vector<1x8x128xbf16> to vector<8x128xbf16>
    %166 = vector.shape_cast %163 : vector<8x128xbf16> to vector<1x8x128xbf16>
    tpu.vector_store %arg6[%c5_79, %c0_80, %c0_81], %166 {strides = array<i32>} : memref<8x8x128xbf16, #tpu.memory_space<vmem>>, vector<1x8x128xbf16>,
    %c6 = arith.constant 6 : index
    %c0_82 = arith.constant 0 : index
    %c0_83 = arith.constant 0 : index
    %167 = vector.load %arg1[%c6, %c0_82, %c0_83] : memref<8x8x128xbf16, #tpu.memory_space<vmem>>, vector<1x8x128xbf16>
    %168 = vector.shape_cast %167 : vector<1x8x128xbf16> to vector<8x128xbf16>
    %169 = tpu.concatenate %168, %163 in 1 : vector<8x128xbf16>, vector<8x128xbf16> -> vector<8x256xbf16>
    %c0_84 = arith.constant 0 : index
    %c0_85 = arith.constant 0 : index
    %170 = vector.load %arg3[%c0_84, %c0_85] : memref<256x256xbf16, #tpu.memory_space<vmem>>, vector<256x256xbf16>
    %cst_86 = arith.constant dense<0.000000e+00> : vector<8x256xf32>
    %171 = tpu.matmul %169, %170, %cst_86 {dimension_numbers = #tpu.dot_dimension_numbers<[1], [0], [0], [1], [0, 0, 1, 1], [], []>} : vector<8x256xbf16>, vector<256x256xbf16>, vector<8x256xf32> -> vector<8x256xf32>
    %172 = vector.broadcast %4 : vector<1x256xf32> to vector<8x256xf32>
    %173 = arith.addf %171, %172 : vector<8x256xf32>
    %174 = vector.extract_strided_slice %173 {offsets = [0, 0], sizes = [8, 128], strides = [1, 1]} : vector<8x256xf32> to vector<8x128xf32>
    %175 = vector.extract_strided_slice %173 {offsets = [0, 128], sizes = [8, 128], strides = [1, 1]} : vector<8x256xf32> to vector<8x128xf32>
    %cst_87 = arith.constant dense<0xFF800000> : vector<8xf32>
    %176 = vector.multi_reduction <maximumf>, %175, %cst_87 [1] : vector<8x128xf32> to vector<8xf32>
    %177 = vector.shape_cast %176 : vector<8xf32> to vector<8x1xf32>
    %178 = vector.broadcast %177 : vector<8x1xf32> to vector<8x128xf32>
    %179 = arith.subf %175, %178 : vector<8x128xf32>
    %180 = math.exp %179 : vector<8x128xf32>
    %cst_88 = arith.constant dense<0.000000e+00> : vector<8xf32>
    %181 = vector.multi_reduction <add>, %180, %cst_88 [1] : vector<8x128xf32> to vector<8xf32>
    %182 = vector.shape_cast %181 : vector<8xf32> to vector<8x1xf32>
    %183 = math.log %182 : vector<8x1xf32>
    %184 = vector.broadcast %183 : vector<8x1xf32> to vector<8x128xf32>
    %185 = arith.subf %179, %184 : vector<8x128xf32>
    %186 = arith.truncf %185 : vector<8x128xf32> to vector<8x128xbf16>
    %c6_89 = arith.constant 6 : index
    %c0_90 = arith.constant 0 : index
    %c0_91 = arith.constant 0 : index
    %187 = vector.load %arg5[%c6_89, %c0_90, %c0_91] : memref<8x8x128xbf16, #tpu.memory_space<vmem>>, vector<1x8x128xbf16>
    %188 = vector.shape_cast %187 : vector<1x8x128xbf16> to vector<8x128xbf16>
    %189 = vector.shape_cast %186 : vector<8x128xbf16> to vector<1x8x128xbf16>
    tpu.vector_store %arg5[%c6_89, %c0_90, %c0_91], %189 {strides = array<i32>} : memref<8x8x128xbf16, #tpu.memory_space<vmem>>, vector<1x8x128xbf16>,
    %190 = arith.truncf %174 : vector<8x128xf32> to vector<8x128xbf16>
    %c6_92 = arith.constant 6 : index
    %c0_93 = arith.constant 0 : index
    %c0_94 = arith.constant 0 : index
    %191 = vector.load %arg6[%c6_92, %c0_93, %c0_94] : memref<8x8x128xbf16, #tpu.memory_space<vmem>>, vector<1x8x128xbf16>
    %192 = vector.shape_cast %191 : vector<1x8x128xbf16> to vector<8x128xbf16>
    %193 = vector.shape_cast %190 : vector<8x128xbf16> to vector<1x8x128xbf16>
    tpu.vector_store %arg6[%c6_92, %c0_93, %c0_94], %193 {strides = array<i32>} : memref<8x8x128xbf16, #tpu.memory_space<vmem>>, vector<1x8x128xbf16>,
    %c7 = arith.constant 7 : index
    %c0_95 = arith.constant 0 : index
    %c0_96 = arith.constant 0 : index
    %194 = vector.load %arg1[%c7, %c0_95, %c0_96] : memref<8x8x128xbf16, #tpu.memory_space<vmem>>, vector<1x8x128xbf16>
    %195 = vector.shape_cast %194 : vector<1x8x128xbf16> to vector<8x128xbf16>
    %196 = tpu.concatenate %195, %190 in 1 : vector<8x128xbf16>, vector<8x128xbf16> -> vector<8x256xbf16>
    %c0_97 = arith.constant 0 : index
    %c0_98 = arith.constant 0 : index
    %197 = vector.load %arg3[%c0_97, %c0_98] : memref<256x256xbf16, #tpu.memory_space<vmem>>, vector<256x256xbf16>
    %cst_99 = arith.constant dense<0.000000e+00> : vector<8x256xf32>
    %198 = tpu.matmul %196, %197, %cst_99 {dimension_numbers = #tpu.dot_dimension_numbers<[1], [0], [0], [1], [0, 0, 1, 1], [], []>} : vector<8x256xbf16>, vector<256x256xbf16>, vector<8x256xf32> -> vector<8x256xf32>
    %199 = vector.broadcast %4 : vector<1x256xf32> to vector<8x256xf32>
    %200 = arith.addf %198, %199 : vector<8x256xf32>
    %201 = vector.extract_strided_slice %200 {offsets = [0, 0], sizes = [8, 128], strides = [1, 1]} : vector<8x256xf32> to vector<8x128xf32>
    %202 = vector.extract_strided_slice %200 {offsets = [0, 128], sizes = [8, 128], strides = [1, 1]} : vector<8x256xf32> to vector<8x128xf32>
    %cst_100 = arith.constant dense<0xFF800000> : vector<8xf32>
    %203 = vector.multi_reduction <maximumf>, %202, %cst_100 [1] : vector<8x128xf32> to vector<8xf32>
    %204 = vector.shape_cast %203 : vector<8xf32> to vector<8x1xf32>
    %205 = vector.broadcast %204 : vector<8x1xf32> to vector<8x128xf32>
    %206 = arith.subf %202, %205 : vector<8x128xf32>
    %207 = math.exp %206 : vector<8x128xf32>
    %cst_101 = arith.constant dense<0.000000e+00> : vector<8xf32>
    %208 = vector.multi_reduction <add>, %207, %cst_101 [1] : vector<8x128xf32> to vector<8xf32>
    %209 = vector.shape_cast %208 : vector<8xf32> to vector<8x1xf32>
    %210 = math.log %209 : vector<8x1xf32>
    %211 = vector.broadcast %210 : vector<8x1xf32> to vector<8x128xf32>
    %212 = arith.subf %206, %211 : vector<8x128xf32>
    %213 = arith.truncf %212 : vector<8x128xf32> to vector<8x128xbf16>
    %c7_102 = arith.constant 7 : index
    %c0_103 = arith.constant 0 : index
    %c0_104 = arith.constant 0 : index
    %214 = vector.load %arg5[%c7_102, %c0_103, %c0_104] : memref<8x8x128xbf16, #tpu.memory_space<vmem>>, vector<1x8x128xbf16>
    %215 = vector.shape_cast %214 : vector<1x8x128xbf16> to vector<8x128xbf16>
    %216 = vector.shape_cast %213 : vector<8x128xbf16> to vector<1x8x128xbf16>
    tpu.vector_store %arg5[%c7_102, %c0_103, %c0_104], %216 {strides = array<i32>} : memref<8x8x128xbf16, #tpu.memory_space<vmem>>, vector<1x8x128xbf16>,
    %217 = arith.truncf %201 : vector<8x128xf32> to vector<8x128xbf16>
    %c7_105 = arith.constant 7 : index
    %c0_106 = arith.constant 0 : index
    %c0_107 = arith.constant 0 : index
    %218 = vector.load %arg6[%c7_105, %c0_106, %c0_107] : memref<8x8x128xbf16, #tpu.memory_space<vmem>>, vector<1x8x128xbf16>
    %219 = vector.shape_cast %218 : vector<1x8x128xbf16> to vector<8x128xbf16>
    %220 = vector.shape_cast %217 : vector<8x128xbf16> to vector<1x8x128xbf16>
    tpu.vector_store %arg6[%c7_105, %c0_106, %c0_107], %220 {strides = array<i32>} : memref<8x8x128xbf16, #tpu.memory_space<vmem>>, vector<1x8x128xbf16>,
    %c0_108 = arith.constant 0 : index
    %c0_109 = arith.constant 0 : index
    %221 = vector.load %arg7[%c0_108, %c0_109] : memref<8x128xbf16, #tpu.memory_space<vmem>>, vector<8x128xbf16>
    tpu.vector_store %arg7[%c0_108, %c0_109], %217 {strides = array<i32>} : memref<8x128xbf16, #tpu.memory_space<vmem>>, vector<8x128xbf16>,
    return
  }
  func.func @transform_0(%arg0: i32) -> (i32, i32, i32) {
    %c0_i32 = arith.constant 0 : i32
    %c0_i32_0 = arith.constant 0 : i32
    %c0_i32_1 = arith.constant 0 : i32
    return %arg0, %c0_i32, %c0_i32_0 : i32, i32, i32
  }
  func.func @transform_1(%arg0: i32) -> (i32, i32) {
    %c0_i32 = arith.constant 0 : i32
    %c0_i32_0 = arith.constant 0 : i32
    %c0_i32_1 = arith.constant 0 : i32
    return %c0_i32, %c0_i32_0 : i32, i32
  }
  func.func @transform_2(%arg0: i32) -> (i32, i32) {
    %c0_i32 = arith.constant 0 : i32
    %c0_i32_0 = arith.constant 0 : i32
    %c0_i32_1 = arith.constant 0 : i32
    return %c0_i32, %c0_i32_0 : i32, i32
  }
  func.func @transform_3(%arg0: i32) -> (i32, i32) {
    %c0_i32 = arith.constant 0 : i32
    %c0_i32_0 = arith.constant 0 : i32
    %c0_i32_1 = arith.constant 0 : i32
    return %c0_i32, %c0_i32_0 : i32, i32
  }
  func.func @transform_4(%arg0: i32) -> (i32, i32, i32) {
    %c0_i32 = arith.constant 0 : i32
    %c0_i32_0 = arith.constant 0 : i32
    %c0_i32_1 = arith.constant 0 : i32
    return %arg0, %c0_i32, %c0_i32_0 : i32, i32, i32
  }
  func.func @transform_5(%arg0: i32) -> (i32, i32, i32) {
    %c0_i32 = arith.constant 0 : i32
    %c0_i32_0 = arith.constant 0 : i32
    %c0_i32_1 = arith.constant 0 : i32
    return %arg0, %c0_i32, %c0_i32_0 : i32, i32, i32
  }
}

</mosaic_0001>

<llo_original>
// kernel: tpu_custom_call.1
$region0: #{tpu_custom_call.1}
  #allocation0 [shape = 'u32[]', space=smem, size = 0x4, offset = 0x4, fixed_abs, tag = 'smem constant byte address 0x4 - core index']
  #allocation1 [shape = 'u32[144,128]{1,0:T(1,128)}', space=vmem, size = 0x12000, scoped, tag = 'internal scratch']
  #allocation2 [shape = 'bf16[8,128]{1,0:T(8,128)(2,1)}', space=vmem, size = 0x800, scoped, tag = 'scratch operand']
  %s0 = inlined_call_operand.hbm [shape: bf16[8,8,128], index: 0, kind: input, shape index: {}]
  %s1 = inlined_call_operand.hbm [shape: bf16[8,128], index: 1, kind: input, shape index: {}]
  %s2 = inlined_call_operand.hbm [shape: bf16[256,256], index: 2, kind: input, shape index: {}]
  %s3 = inlined_call_operand.vmem [shape: f32[1,256], index: 3, kind: input, shape index: {}]
  %s4 = inlined_call_operand.hbm [shape: bf16[8,8,128], index: 4, kind: output, shape index: {0}]
  %s5 = inlined_call_operand.hbm [shape: bf16[8,8,128], index: 5, kind: output, shape index: {1}]
  %6 = xla_tuple %s4, %s5
  %s7 = sld [smem:[#allocation0]]
  $region50: #{tpu_custom_call.1} parent=0
    _
  %s9 = ssub.s32 1, %s7
  %s10 = scalar_select 0, %s9, %s7
  $region1: #{tpu_custom_call.1} parent=0
    #allocation3 [shape = 'u8[16384]{0}', space=vmem, size = 0x4000, scoped, tag = 'input window, operand 0, single buffered']
    #allocation4 [shape = 's32[1]{0}', space=sflag, size = 0x4, scoped, tag = 'scoped memory for tpu_custom_call.1']
    #allocation5 [shape = 's32[1]{0}', space=sflag, size = 0x4, scoped, tag = 'scoped memory for tpu_custom_call.1']
    #allocation6 [shape = 'u8[2048]{0}', space=vmem, size = 0x800, scoped, tag = 'input window, operand 1, single buffered']
    #allocation7 [shape = 's32[1]{0}', space=sflag, size = 0x4, scoped, tag = 'scoped memory for tpu_custom_call.1']
    #allocation8 [shape = 'u8[131072]{0}', space=vmem, size = 0x20000, scoped, tag = 'input window, operand 2, single buffered']
    #allocation9 [shape = 'u8[16384]{0}', space=vmem, size = 0x4000, scoped, tag = 'output window, operand 0, single buffered']
    #allocation10 [shape = 'u8[16384]{0}', space=vmem, size = 0x4000, scoped, tag = 'output window, operand 1, single buffered']
    #allocation11 [shape = 's32[1]{0}', space=sflag, size = 0x4, scoped, tag = 'scoped memory for tpu_custom_call.1']
    %11 = vsyncpa [#allocation4], 0
    %12 = vsyncpa [#allocation7], 0
    %13 = vsyncpa [#allocation5], 0
    %14 = vsyncpa [#allocation11], 0
    // Predicated region
    $region2: #{tpu_custom_call.1} parent=1 // pred_check
      _
    $region3: #{tpu_custom_call.1} parent=1 // pred_check_branch
      %16 = sbr.rel (0) target = $region5
    $region4: #{tpu_custom_call.1} parent=1 // pred_region
      %s18 = ssub.s32 512, 512
      %19 = vsyncadd [#allocation4], %s18
      %s20 = sshll.u32 [#allocation3], 4
      %s21 = int_to_ptr.vmem [resolvable:$true] %s20
      %26 = dma.hbm_to_vmem [thread:$0]  %s0, 512, %s21, [#allocation4], 64, 64, 4
    $region5: #{tpu_custom_call.1} parent=1 // pred_fallthru
      _
    // Predicated region
    $region6: #{tpu_custom_call.1} parent=1 // pred_check
      _
    $region7: #{tpu_custom_call.1} parent=1 // pred_check_branch
      %28 = sbr.rel (0) target = $region9
    $region8: #{tpu_custom_call.1} parent=1 // pred_region
      %s30 = ssub.s32 64, 64
      %31 = vsyncadd [#allocation7], %s30
      %s33 = sshll.u32 [#allocation6], 4
      %s34 = int_to_ptr.vmem [resolvable:$true] %s33
      %36 = dma.hbm_to_vmem [thread:$0]  %s1, 64, %s34, [#allocation7]
    $region9: #{tpu_custom_call.1} parent=1 // pred_fallthru
      _
    // Predicated region
    $region10: #{tpu_custom_call.1} parent=1 // pred_check
      _
    $region11: #{tpu_custom_call.1} parent=1 // pred_check_branch
      %38 = sbr.rel (0) target = $region13
    $region12: #{tpu_custom_call.1} parent=1 // pred_region
      %s40 = ssub.s32 4096, 4096
      %41 = vsyncadd [#allocation7], %s40
      %s42 = sshll.u32 [#allocation8], 4
      %s43 = int_to_ptr.vmem [resolvable:$true] %s42
      %48 = dma.hbm_to_vmem [thread:$0]  %s2, 4096, %s43, [#allocation7], 128, 128, 8
    $region13: #{tpu_custom_call.1} parent=1 // pred_fallthru
      _
    // Predicated region
    $region14: #{tpu_custom_call.1} parent=1 // pred_check
      _
    $region15: #{tpu_custom_call.1} parent=1 // pred_check_branch
      %50 = sbr.rel (0) target = $region17
    $region16: #{tpu_custom_call.1} parent=1 // pred_region
      _
    $region17: #{tpu_custom_call.1} parent=1 // pred_fallthru
      _
    // Predicated region
    $region18: #{tpu_custom_call.1} parent=1 // pred_check
      _
    $region19: #{tpu_custom_call.1} parent=1 // pred_check_branch
      %52 = sbr.rel (0) target = $region21
    $region20: #{tpu_custom_call.1} parent=1 // pred_region
      %53 = dma.done [#allocation4], 512
    $region21: #{tpu_custom_call.1} parent=1 // pred_fallthru
      _
    // Predicated region
    $region22: #{tpu_custom_call.1} parent=1 // pred_check
      _
    $region23: #{tpu_custom_call.1} parent=1 // pred_check_branch
      %55 = sbr.rel (0) target = $region25
    $region24: #{tpu_custom_call.1} parent=1 // pred_region
      %56 = dma.done [#allocation7], 64
    $region25: #{tpu_custom_call.1} parent=1 // pred_fallthru
      _
    // Predicated region
    $region26: #{tpu_custom_call.1} parent=1 // pred_check
      _
    $region27: #{tpu_custom_call.1} parent=1 // pred_check_branch
      %58 = sbr.rel (0) target = $region29
    $region28: #{tpu_custom_call.1} parent=1 // pred_region
      %59 = dma.done [#allocation7], 4096
    $region29: #{tpu_custom_call.1} parent=1 // pred_fallthru
      _
    %p60 = scmp.eq.s32.totalorder 0, 0
    // Predicated region
    $region30: #{tpu_custom_call.1} parent=1 // pred_check
      %p61 = pneg %p60
    $region31: #{tpu_custom_call.1} parent=1 // pred_check_branch
      %63 = sbr.rel (%p61) target = $region33
    $region32: #{tpu_custom_call.1} parent=1 // pred_region
      %v64 = vld [vmem:[#allocation6] sm:$0xf]
      %65 = vst [vmem:[#allocation2] sm:$0xf] %v64
    $region33: #{tpu_custom_call.1} parent=1 // pred_fallthru
      _
    %v66 = vld [vmem:[#allocation2] sm:$0xf]
    %v67 = vld [vmem:[%s3] sm:$0x3]
    %v68 = vld [vmem:[#allocation3] sm:$0xf]
    %v69 = vld [vmem:[#allocation8] sm:$0xff]
    %v70 = vld [vmem:[#allocation8 + $0x8] sm:$0xff]
    %v71 = vld [vmem:[#allocation8 + $0x10] sm:$0xff]
    %v72 = vld [vmem:[#allocation8 + $0x18] sm:$0xff]
    %v73 = vld [vmem:[#allocation8 + $0x20] sm:$0xff]
    %v74 = vld [vmem:[#allocation8 + $0x28] sm:$0xff]
    %v75 = vld [vmem:[#allocation8 + $0x30] sm:$0xff]
    %v76 = vld [vmem:[#allocation8 + $0x38] sm:$0xff]
    %v77 = vld [vmem:[#allocation8 + $0x40] sm:$0xff]
    %v78 = vld [vmem:[#allocation8 + $0x48] sm:$0xff]
    %v79 = vld [vmem:[#allocation8 + $0x50] sm:$0xff]
    %v80 = vld [vmem:[#allocation8 + $0x58] sm:$0xff]
    %v81 = vld [vmem:[#allocation8 + $0x60] sm:$0xff]
    %v82 = vld [vmem:[#allocation8 + $0x68] sm:$0xff]
    %v83 = vld [vmem:[#allocation8 + $0x70] sm:$0xff]
    %v84 = vld [vmem:[#allocation8 + $0x78] sm:$0xff]
    %v85 = vld [vmem:[#allocation8 + $0x80] sm:$0xff]
    %v86 = vld [vmem:[#allocation8 + $0x88] sm:$0xff]
    %v87 = vld [vmem:[#allocation8 + $0x90] sm:$0xff]
    %v88 = vld [vmem:[#allocation8 + $0x98] sm:$0xff]
    %v89 = vld [vmem:[#allocation8 + $0xa0] sm:$0xff]
    %v90 = vld [vmem:[#allocation8 + $0xa8] sm:$0xff]
    %v91 = vld [vmem:[#allocation8 + $0xb0] sm:$0xff]
    %v92 = vld [vmem:[#allocation8 + $0xb8] sm:$0xff]
    %v93 = vld [vmem:[#allocation8 + $0xc0] sm:$0xff]
    %v94 = vld [vmem:[#allocation8 + $0xc8] sm:$0xff]
    %v95 = vld [vmem:[#allocation8 + $0xd0] sm:$0xff]
    %v96 = vld [vmem:[#allocation8 + $0xd8] sm:$0xff]
    %v97 = vld [vmem:[#allocation8 + $0xe0] sm:$0xff]
    %v98 = vld [vmem:[#allocation8 + $0xe8] sm:$0xff]
    %v99 = vld [vmem:[#allocation8 + $0xf0] sm:$0xff]
    %v100 = vld [vmem:[#allocation8 + $0xf8] sm:$0xff]
    %v102 = vlaneseq
    %v103 = vshrl.u32 %v102, 7
    %v104 = vsub.s32 0, %v103
    %v105 = vrot.slane %v67, %v104
    %v106 = vlaneseq
    %v107 = vshrl.u32 %v106, 7
    %v108 = vsub.s32 1, %v107
    %v109 = vrot.slane %v67, %v108
    %v144 = vunpack.c.l.b16 %v69
    %v145 = vunpack.c.h.b16 %v69
    %v146 = vunpack.c.l.b16 %v70
    %v147 = vunpack.c.h.b16 %v70
    %v148 = vunpack.c.l.b16 %v71
    %v149 = vunpack.c.h.b16 %v71
    %v150 = vunpack.c.l.b16 %v72
    %v151 = vunpack.c.h.b16 %v72
    %v152 = vunpack.c.l.b16 %v73
    %v153 = vunpack.c.h.b16 %v73
    %v154 = vunpack.c.l.b16 %v74
    %v155 = vunpack.c.h.b16 %v74
    %v156 = vunpack.c.l.b16 %v75
    %v157 = vunpack.c.h.b16 %v75
    %v158 = vunpack.c.l.b16 %v76
    %v159 = vunpack.c.h.b16 %v76
    %v160 = vunpack.c.l.b16 %v77
    %v161 = vunpack.c.h.b16 %v77
    %v162 = vunpack.c.l.b16 %v78
    %v163 = vunpack.c.h.b16 %v78
    %v164 = vunpack.c.l.b16 %v79
    %v165 = vunpack.c.h.b16 %v79
    %v166 = vunpack.c.l.b16 %v80
    %v167 = vunpack.c.h.b16 %v80
    %v168 = vunpack.c.l.b16 %v81
    %v169 = vunpack.c.h.b16 %v81
    %v170 = vunpack.c.l.b16 %v82
    %v171 = vunpack.c.h.b16 %v82
    %v172 = vunpack.c.l.b16 %v83
    %v173 = vunpack.c.h.b16 %v83
    %v174 = vunpack.c.l.b16 %v84
    %v175 = vunpack.c.h.b16 %v84
    %v176 = vunpack.c.l.b16 %v85
    %v177 = vunpack.c.h.b16 %v85
    %v178 = vunpack.c.l.b16 %v86
    %v179 = vunpack.c.h.b16 %v86
    %v180 = vunpack.c.l.b16 %v87
    %v181 = vunpack.c.h.b16 %v87
    %v182 = vunpack.c.l.b16 %v88
    %v183 = vunpack.c.h.b16 %v88
    %v184 = vunpack.c.l.b16 %v89
    %v185 = vunpack.c.h.b16 %v89
    %v186 = vunpack.c.l.b16 %v90
    %v187 = vunpack.c.h.b16 %v90
    %v188 = vunpack.c.l.b16 %v91
    %v189 = vunpack.c.h.b16 %v91
    %v190 = vunpack.c.l.b16 %v92
    %v191 = vunpack.c.h.b16 %v92
    %v192 = vunpack.c.l.b16 %v93
    %v193 = vunpack.c.h.b16 %v93
    %v194 = vunpack.c.l.b16 %v94
    %v195 = vunpack.c.h.b16 %v94
    %v196 = vunpack.c.l.b16 %v95
    %v197 = vunpack.c.h.b16 %v95
    %v198 = vunpack.c.l.b16 %v96
    %v199 = vunpack.c.h.b16 %v96
    %v200 = vunpack.c.l.b16 %v97
    %v201 = vunpack.c.h.b16 %v97
    %v202 = vunpack.c.l.b16 %v98
    %v203 = vunpack.c.h.b16 %v98
    %v204 = vunpack.c.l.b16 %v99
    %v205 = vunpack.c.h.b16 %v99
    %v206 = vunpack.c.l.b16 %v100
    %v207 = vunpack.c.h.b16 %v100
    %v208 = vpack.c.b16 %v146, %v144
    %v209 = vpack.c.b16 %v147, %v145
    %v210 = vpack.c.b16 %v150, %v148
    %v211 = vpack.c.b16 %v151, %v149
    %v212 = vpack.c.b16 %v154, %v152
    %v213 = vpack.c.b16 %v155, %v153
    %v214 = vpack.c.b16 %v158, %v156
    %v215 = vpack.c.b16 %v159, %v157
    %v216 = vpack.c.b16 %v162, %v160
    %v217 = vpack.c.b16 %v163, %v161
    %v218 = vpack.c.b16 %v166, %v164
    %v219 = vpack.c.b16 %v167, %v165
    %v220 = vpack.c.b16 %v170, %v168
    %v221 = vpack.c.b16 %v171, %v169
    %v222 = vpack.c.b16 %v174, %v172
    %v223 = vpack.c.b16 %v175, %v173
    %v224 = vpack.c.b16 %v178, %v176
    %v225 = vpack.c.b16 %v179, %v177
    %v226 = vpack.c.b16 %v182, %v180
    %v227 = vpack.c.b16 %v183, %v181
    %v228 = vpack.c.b16 %v186, %v184
    %v229 = vpack.c.b16 %v187, %v185
    %v230 = vpack.c.b16 %v190, %v188
    %v231 = vpack.c.b16 %v191, %v189
    %v232 = vpack.c.b16 %v194, %v192
    %v233 = vpack.c.b16 %v195, %v193
    %v234 = vpack.c.b16 %v198, %v196
    %v235 = vpack.c.b16 %v199, %v197
    %v236 = vpack.c.b16 %v202, %v200
    %v237 = vpack.c.b16 %v203, %v201
    %v238 = vpack.c.b16 %v206, %v204
    %v239 = vpack.c.b16 %v207, %v205
    %272 = vmatprep.subr.bf16.mxu0 %v223
    %273 = vmatpush1.bf16.msra.mxu0 %v222
    %274 = vmatprep.subr.bf16.mxu0 %v221
    %275 = vmatpush1.bf16.msra.mxu0 %v220
    %276 = vmatprep.subr.bf16.mxu0 %v219
    %277 = vmatpush1.bf16.msra.mxu0 %v218
    %278 = vmatprep.subr.bf16.mxu0 %v217
    %279 = vmatpush1.bf16.msra.mxu0 %v216
    %280 = vmatprep.subr.bf16.mxu0 %v215
    %281 = vmatpush1.bf16.msra.mxu0 %v214
    %282 = vmatprep.subr.bf16.mxu0 %v213
    %283 = vmatpush1.bf16.msra.mxu0 %v212
    %284 = vmatprep.subr.bf16.mxu0 %v211
    %285 = vmatpush1.bf16.msra.mxu0 %v210
    %286 = vmatprep.subr.bf16.mxu0 %v209
    %287 = vmatpush1.bf16.msra.mxu0 %v208
    %288 = vmatprep.subr.bf16.mxu0 %v239
    %289 = vmatpush2.bf16.msra.mxu0 %v238
    %290 = vmatprep.subr.bf16.mxu0 %v237
    %291 = vmatpush2.bf16.msra.mxu0 %v236
    %292 = vmatprep.subr.bf16.mxu0 %v235
    %293 = vmatpush2.bf16.msra.mxu0 %v234
    %294 = vmatprep.subr.bf16.mxu0 %v233
    %295 = vmatpush2.bf16.msra.mxu0 %v232
    %296 = vmatprep.subr.bf16.mxu0 %v231
    %297 = vmatpush2.bf16.msra.mxu0 %v230
    %298 = vmatprep.subr.bf16.mxu0 %v229
    %299 = vmatpush2.bf16.msra.mxu0 %v228
    %300 = vmatprep.subr.bf16.mxu0 %v227
    %301 = vmatpush2.bf16.msra.mxu0 %v226
    %302 = vmatprep.subr.bf16.mxu0 %v225
    %303 = vmatpush2.bf16.msra.mxu0 %v224
    %304 = vmatprep.mubr.bf16.mxu0 %v66
    %305 = vmatmul.mubr.bf16.gmra.mxu0 %v68
    %v306 = vpop.f32.mrf.mxu0
    %v307 = vadd.f32 %v105, %v306
    %v308 = vpop.f32.mrf.mxu0
    %v309 = vadd.f32 %v109, %v308
    %v310 = vpop.f32.mrf.mxu0
    %v311 = vpop.f32.mrf.mxu0
    %312 = vdwg.mxu0
    %313 = vmax.xlane.f32.xlu0 %v309
    %v314 = vpop.xlane.xlu0 %313
    %v315 = vsub.f32 %v309, %v314
    %v316 = vmul.f32 %v315, 1.442695
    %v317 = vpow.pop %v316
    %318 = vadd.xlane.f32.xlu0 %v317
    %v319 = vpop.xlane.xlu0 %318
    %v320 = vlog2.pop %v319
    %v321 = vmul.f32 %v320, 0.6931472
    %v322 = vsub.f32 %v315, %v321
    %v323 = vpack.c.bf16 %v322, %v322
    %324 = vst [vmem:[#allocation9] sm:$0xf] %v323
    %v325 = vpack.c.bf16 %v307, %v307
    %326 = vst [vmem:[#allocation10] sm:$0xf] %v325
    %s327 = scalar_lea.vmem [#allocation3], 4
    %v328 = vld [vmem:[%s327] sm:$0xf]
    %v329 = vld [vmem:[#allocation8] sm:$0xff]
    %v330 = vld [vmem:[#allocation8 + $0x8] sm:$0xff]
    %v331 = vld [vmem:[#allocation8 + $0x10] sm:$0xff]
    %v332 = vld [vmem:[#allocation8 + $0x18] sm:$0xff]
    %v333 = vld [vmem:[#allocation8 + $0x20] sm:$0xff]
    %v334 = vld [vmem:[#allocation8 + $0x28] sm:$0xff]
    %v335 = vld [vmem:[#allocation8 + $0x30] sm:$0xff]
    %v336 = vld [vmem:[#allocation8 + $0x38] sm:$0xff]
    %v337 = vld [vmem:[#allocation8 + $0x40] sm:$0xff]
    %v338 = vld [vmem:[#allocation8 + $0x48] sm:$0xff]
    %v339 = vld [vmem:[#allocation8 + $0x50] sm:$0xff]
    %v340 = vld [vmem:[#allocation8 + $0x58] sm:$0xff]
    %v341 = vld [vmem:[#allocation8 + $0x60] sm:$0xff]
    %v342 = vld [vmem:[#allocation8 + $0x68] sm:$0xff]
    %v343 = vld [vmem:[#allocation8 + $0x70] sm:$0xff]
    %v344 = vld [vmem:[#allocation8 + $0x78] sm:$0xff]
    %v345 = vld [vmem:[#allocation8 + $0x80] sm:$0xff]
    %v346 = vld [vmem:[#allocation8 + $0x88] sm:$0xff]
    %v347 = vld [vmem:[#allocation8 + $0x90] sm:$0xff]
    %v348 = vld [vmem:[#allocation8 + $0x98] sm:$0xff]
    %v349 = vld [vmem:[#allocation8 + $0xa0] sm:$0xff]
    %v350 = vld [vmem:[#allocation8 + $0xa8] sm:$0xff]
    %v351 = vld [vmem:[#allocation8 + $0xb0] sm:$0xff]
    %v352 = vld [vmem:[#allocation8 + $0xb8] sm:$0xff]
    %v353 = vld [vmem:[#allocation8 + $0xc0] sm:$0xff]
    %v354 = vld [vmem:[#allocation8 + $0xc8] sm:$0xff]
    %v355 = vld [vmem:[#allocation8 + $0xd0] sm:$0xff]
    %v356 = vld [vmem:[#allocation8 + $0xd8] sm:$0xff]
    %v357 = vld [vmem:[#allocation8 + $0xe0] sm:$0xff]
    %v358 = vld [vmem:[#allocation8 + $0xe8] sm:$0xff]
    %v359 = vld [vmem:[#allocation8 + $0xf0] sm:$0xff]
    %v360 = vld [vmem:[#allocation8 + $0xf8] sm:$0xff]
    %v393 = vunpack.c.l.b16 %v329
    %v394 = vunpack.c.h.b16 %v329
    %v395 = vunpack.c.l.b16 %v330
    %v396 = vunpack.c.h.b16 %v330
    %v397 = vunpack.c.l.b16 %v331
    %v398 = vunpack.c.h.b16 %v331
    %v399 = vunpack.c.l.b16 %v332
    %v400 = vunpack.c.h.b16 %v332
    %v401 = vunpack.c.l.b16 %v333
    %v402 = vunpack.c.h.b16 %v333
    %v403 = vunpack.c.l.b16 %v334
    %v404 = vunpack.c.h.b16 %v334
    %v405 = vunpack.c.l.b16 %v335
    %v406 = vunpack.c.h.b16 %v335
    %v407 = vunpack.c.l.b16 %v336
    %v408 = vunpack.c.h.b16 %v336
    %v409 = vunpack.c.l.b16 %v337
    %v410 = vunpack.c.h.b16 %v337
    %v411 = vunpack.c.l.b16 %v338
    %v412 = vunpack.c.h.b16 %v338
    %v413 = vunpack.c.l.b16 %v339
    %v414 = vunpack.c.h.b16 %v339
    %v415 = vunpack.c.l.b16 %v340
    %v416 = vunpack.c.h.b16 %v340
    %v417 = vunpack.c.l.b16 %v341
    %v418 = vunpack.c.h.b16 %v341
    %v419 = vunpack.c.l.b16 %v342
    %v420 = vunpack.c.h.b16 %v342
    %v421 = vunpack.c.l.b16 %v343
    %v422 = vunpack.c.h.b16 %v343
    %v423 = vunpack.c.l.b16 %v344
    %v424 = vunpack.c.h.b16 %v344
    %v425 = vunpack.c.l.b16 %v345
    %v426 = vunpack.c.h.b16 %v345
    %v427 = vunpack.c.l.b16 %v346
    %v428 = vunpack.c.h.b16 %v346
    %v429 = vunpack.c.l.b16 %v347
    %v430 = vunpack.c.h.b16 %v347
    %v431 = vunpack.c.l.b16 %v348
    %v432 = vunpack.c.h.b16 %v348
    %v433 = vunpack.c.l.b16 %v349
    %v434 = vunpack.c.h.b16 %v349
    %v435 = vunpack.c.l.b16 %v350
    %v436 = vunpack.c.h.b16 %v350
    %v437 = vunpack.c.l.b16 %v351
    %v438 = vunpack.c.h.b16 %v351
    %v439 = vunpack.c.l.b16 %v352
    %v440 = vunpack.c.h.b16 %v352
    %v441 = vunpack.c.l.b16 %v353
    %v442 = vunpack.c.h.b16 %v353
    %v443 = vunpack.c.l.b16 %v354
    %v444 = vunpack.c.h.b16 %v354
    %v445 = vunpack.c.l.b16 %v355
    %v446 = vunpack.c.h.b16 %v355
    %v447 = vunpack.c.l.b16 %v356
    %v448 = vunpack.c.h.b16 %v356
    %v449 = vunpack.c.l.b16 %v357
    %v450 = vunpack.c.h.b16 %v357
    %v451 = vunpack.c.l.b16 %v358
    %v452 = vunpack.c.h.b16 %v358
    %v453 = vunpack.c.l.b16 %v359
    %v454 = vunpack.c.h.b16 %v359
    %v455 = vunpack.c.l.b16 %v360
    %v456 = vunpack.c.h.b16 %v360
    %v457 = vpack.c.b16 %v395, %v393
    %v458 = vpack.c.b16 %v396, %v394
    %v459 = vpack.c.b16 %v399, %v397
    %v460 = vpack.c.b16 %v400, %v398
    %v461 = vpack.c.b16 %v403, %v401
    %v462 = vpack.c.b16 %v404, %v402
    %v463 = vpack.c.b16 %v407, %v405
    %v464 = vpack.c.b16 %v408, %v406
    %v465 = vpack.c.b16 %v411, %v409
    %v466 = vpack.c.b16 %v412, %v410
    %v467 = vpack.c.b16 %v415, %v413
    %v468 = vpack.c.b16 %v416, %v414
    %v469 = vpack.c.b16 %v419, %v417
    %v470 = vpack.c.b16 %v420, %v418
    %v471 = vpack.c.b16 %v423, %v421
    %v472 = vpack.c.b16 %v424, %v422
    %v473 = vpack.c.b16 %v427, %v425
    %v474 = vpack.c.b16 %v428, %v426
    %v475 = vpack.c.b16 %v431, %v429
    %v476 = vpack.c.b16 %v432, %v430
    %v477 = vpack.c.b16 %v435, %v433
    %v478 = vpack.c.b16 %v436, %v434
    %v479 = vpack.c.b16 %v439, %v437
    %v480 = vpack.c.b16 %v440, %v438
    %v481 = vpack.c.b16 %v443, %v441
    %v482 = vpack.c.b16 %v444, %v442
    %v483 = vpack.c.b16 %v447, %v445
    %v484 = vpack.c.b16 %v448, %v446
    %v485 = vpack.c.b16 %v451, %v449
    %v486 = vpack.c.b16 %v452, %v450
    %v487 = vpack.c.b16 %v455, %v453
    %v488 = vpack.c.b16 %v456, %v454
    %521 = vmatprep.subr.bf16.mxu0 %v472
    %522 = vmatpush1.bf16.msra.mxu0 %v471
    %523 = vmatprep.subr.bf16.mxu0 %v470
    %524 = vmatpush1.bf16.msra.mxu0 %v469
    %525 = vmatprep.subr.bf16.mxu0 %v468
    %526 = vmatpush1.bf16.msra.mxu0 %v467
    %527 = vmatprep.subr.bf16.mxu0 %v466
    %528 = vmatpush1.bf16.msra.mxu0 %v465
    %529 = vmatprep.subr.bf16.mxu0 %v464
    %530 = vmatpush1.bf16.msra.mxu0 %v463
    %531 = vmatprep.subr.bf16.mxu0 %v462
    %532 = vmatpush1.bf16.msra.mxu0 %v461
    %533 = vmatprep.subr.bf16.mxu0 %v460
    %534 = vmatpush1.bf16.msra.mxu0 %v459
    %535 = vmatprep.subr.bf16.mxu0 %v458
    %536 = vmatpush1.bf16.msra.mxu0 %v457
    %537 = vmatprep.subr.bf16.mxu0 %v488
    %538 = vmatpush2.bf16.msra.mxu0 %v487
    %539 = vmatprep.subr.bf16.mxu0 %v486
    %540 = vmatpush2.bf16.msra.mxu0 %v485
    %541 = vmatprep.subr.bf16.mxu0 %v484
    %542 = vmatpush2.bf16.msra.mxu0 %v483
    %543 = vmatprep.subr.bf16.mxu0 %v482
    %544 = vmatpush2.bf16.msra.mxu0 %v481
    %545 = vmatprep.subr.bf16.mxu0 %v480
    %546 = vmatpush2.bf16.msra.mxu0 %v479
    %547 = vmatprep.subr.bf16.mxu0 %v478
    %548 = vmatpush2.bf16.msra.mxu0 %v477
    %549 = vmatprep.subr.bf16.mxu0 %v476
    %550 = vmatpush2.bf16.msra.mxu0 %v475
    %551 = vmatprep.subr.bf16.mxu0 %v474
    %552 = vmatpush2.bf16.msra.mxu0 %v473
    %553 = vmatprep.mubr.bf16.mxu0 %v325
    %554 = vmatmul.mubr.bf16.gmra.mxu0 %v328
    %v555 = vpop.f32.mrf.mxu0
    %v556 = vadd.f32 %v105, %v555
    %v557 = vpop.f32.mrf.mxu0
    %v558 = vadd.f32 %v109, %v557
    %v559 = vpop.f32.mrf.mxu0
    %v560 = vpop.f32.mrf.mxu0
    %561 = vdwg.mxu0
    %562 = vmax.xlane.f32.xlu0 %v558
    %v563 = vpop.xlane.xlu0 %562
    %v564 = vsub.f32 %v558, %v563
    %v565 = vmul.f32 %v564, 1.442695
    %v566 = vpow.pop %v565
    %567 = vadd.xlane.f32.xlu0 %v566
    %v568 = vpop.xlane.xlu0 %567
    %v569 = vlog2.pop %v568
    %v570 = vmul.f32 %v569, 0.6931472
    %v571 = vsub.f32 %v564, %v570
    %v572 = vpack.c.bf16 %v571, %v571
    %s573 = scalar_lea.vmem [#allocation9], 4
    %574 = vst [vmem:[%s573] sm:$0xf] %v572
    %v575 = vpack.c.bf16 %v556, %v556
    %s576 = scalar_lea.vmem [#allocation10], 4
    %577 = vst [vmem:[%s576] sm:$0xf] %v575
    %s578 = scalar_lea.vmem [#allocation3], 8
    %v579 = vld [vmem:[%s578] sm:$0xf]
    %v580 = vld [vmem:[#allocation8] sm:$0xff]
    %v581 = vld [vmem:[#allocation8 + $0x8] sm:$0xff]
    %v582 = vld [vmem:[#allocation8 + $0x10] sm:$0xff]
    %v583 = vld [vmem:[#allocation8 + $0x18] sm:$0xff]
    %v584 = vld [vmem:[#allocation8 + $0x20] sm:$0xff]
    %v585 = vld [vmem:[#allocation8 + $0x28] sm:$0xff]
    %v586 = vld [vmem:[#allocation8 + $0x30] sm:$0xff]
    %v587 = vld [vmem:[#allocation8 + $0x38] sm:$0xff]
    %v588 = vld [vmem:[#allocation8 + $0x40] sm:$0xff]
    %v589 = vld [vmem:[#allocation8 + $0x48] sm:$0xff]
    %v590 = vld [vmem:[#allocation8 + $0x50] sm:$0xff]
    %v591 = vld [vmem:[#allocation8 + $0x58] sm:$0xff]
    %v592 = vld [vmem:[#allocation8 + $0x60] sm:$0xff]
    %v593 = vld [vmem:[#allocation8 + $0x68] sm:$0xff]
    %v594 = vld [vmem:[#allocation8 + $0x70] sm:$0xff]
    %v595 = vld [vmem:[#allocation8 + $0x78] sm:$0xff]
    %v596 = vld [vmem:[#allocation8 + $0x80] sm:$0xff]
    %v597 = vld [vmem:[#allocation8 + $0x88] sm:$0xff]
    %v598 = vld [vmem:[#allocation8 + $0x90] sm:$0xff]
    %v599 = vld [vmem:[#allocation8 + $0x98] sm:$0xff]
    %v600 = vld [vmem:[#allocation8 + $0xa0] sm:$0xff]
    %v601 = vld [vmem:[#allocation8 + $0xa8] sm:$0xff]
    %v602 = vld [vmem:[#allocation8 + $0xb0] sm:$0xff]
    %v603 = vld [vmem:[#allocation8 + $0xb8] sm:$0xff]
    %v604 = vld [vmem:[#allocation8 + $0xc0] sm:$0xff]
    %v605 = vld [vmem:[#allocation8 + $0xc8] sm:$0xff]
    %v606 = vld [vmem:[#allocation8 + $0xd0] sm:$0xff]
    %v607 = vld [vmem:[#allocation8 + $0xd8] sm:$0xff]
    %v608 = vld [vmem:[#allocation8 + $0xe0] sm:$0xff]
    %v609 = vld [vmem:[#allocation8 + $0xe8] sm:$0xff]
    %v610 = vld [vmem:[#allocation8 + $0xf0] sm:$0xff]
    %v611 = vld [vmem:[#allocation8 + $0xf8] sm:$0xff]
    %v644 = vunpack.c.l.b16 %v580
    %v645 = vunpack.c.h.b16 %v580
    %v646 = vunpack.c.l.b16 %v581
    %v647 = vunpack.c.h.b16 %v581
    %v648 = vunpack.c.l.b16 %v582
    %v649 = vunpack.c.h.b16 %v582
    %v650 = vunpack.c.l.b16 %v583
    %v651 = vunpack.c.h.b16 %v583
    %v652 = vunpack.c.l.b16 %v584
    %v653 = vunpack.c.h.b16 %v584
    %v654 = vunpack.c.l.b16 %v585
    %v655 = vunpack.c.h.b16 %v585
    %v656 = vunpack.c.l.b16 %v586
    %v657 = vunpack.c.h.b16 %v586
    %v658 = vunpack.c.l.b16 %v587
    %v659 = vunpack.c.h.b16 %v587
    %v660 = vunpack.c.l.b16 %v588
    %v661 = vunpack.c.h.b16 %v588
    %v662 = vunpack.c.l.b16 %v589
    %v663 = vunpack.c.h.b16 %v589
    %v664 = vunpack.c.l.b16 %v590
    %v665 = vunpack.c.h.b16 %v590
    %v666 = vunpack.c.l.b16 %v591
    %v667 = vunpack.c.h.b16 %v591
    %v668 = vunpack.c.l.b16 %v592
    %v669 = vunpack.c.h.b16 %v592
    %v670 = vunpack.c.l.b16 %v593
    %v671 = vunpack.c.h.b16 %v593
    %v672 = vunpack.c.l.b16 %v594
    %v673 = vunpack.c.h.b16 %v594
    %v674 = vunpack.c.l.b16 %v595
    %v675 = vunpack.c.h.b16 %v595
    %v676 = vunpack.c.l.b16 %v596
    %v677 = vunpack.c.h.b16 %v596
    %v678 = vunpack.c.l.b16 %v597
    %v679 = vunpack.c.h.b16 %v597
    %v680 = vunpack.c.l.b16 %v598
    %v681 = vunpack.c.h.b16 %v598
    %v682 = vunpack.c.l.b16 %v599
    %v683 = vunpack.c.h.b16 %v599
    %v684 = vunpack.c.l.b16 %v600
    %v685 = vunpack.c.h.b16 %v600
    %v686 = vunpack.c.l.b16 %v601
    %v687 = vunpack.c.h.b16 %v601
    %v688 = vunpack.c.l.b16 %v602
    %v689 = vunpack.c.h.b16 %v602
    %v690 = vunpack.c.l.b16 %v603
    %v691 = vunpack.c.h.b16 %v603
    %v692 = vunpack.c.l.b16 %v604
    %v693 = vunpack.c.h.b16 %v604
    %v694 = vunpack.c.l.b16 %v605
    %v695 = vunpack.c.h.b16 %v605
    %v696 = vunpack.c.l.b16 %v606
    %v697 = vunpack.c.h.b16 %v606
    %v698 = vunpack.c.l.b16 %v607
    %v699 = vunpack.c.h.b16 %v607
    %v700 = vunpack.c.l.b16 %v608
    %v701 = vunpack.c.h.b16 %v608
    %v702 = vunpack.c.l.b16 %v609
    %v703 = vunpack.c.h.b16 %v609
    %v704 = vunpack.c.l.b16 %v610
    %v705 = vunpack.c.h.b16 %v610
    %v706 = vunpack.c.l.b16 %v611
    %v707 = vunpack.c.h.b16 %v611
    %v708 = vpack.c.b16 %v646, %v644
    %v709 = vpack.c.b16 %v647, %v645
    %v710 = vpack.c.b16 %v650, %v648
    %v711 = vpack.c.b16 %v651, %v649
    %v712 = vpack.c.b16 %v654, %v652
    %v713 = vpack.c.b16 %v655, %v653
    %v714 = vpack.c.b16 %v658, %v656
    %v715 = vpack.c.b16 %v659, %v657
    %v716 = vpack.c.b16 %v662, %v660
    %v717 = vpack.c.b16 %v663, %v661
    %v718 = vpack.c.b16 %v666, %v664
    %v719 = vpack.c.b16 %v667, %v665
    %v720 = vpack.c.b16 %v670, %v668
    %v721 = vpack.c.b16 %v671, %v669
    %v722 = vpack.c.b16 %v674, %v672
    %v723 = vpack.c.b16 %v675, %v673
    %v724 = vpack.c.b16 %v678, %v676
    %v725 = vpack.c.b16 %v679, %v677
    %v726 = vpack.c.b16 %v682, %v680
    %v727 = vpack.c.b16 %v683, %v681
    %v728 = vpack.c.b16 %v686, %v684
    %v729 = vpack.c.b16 %v687, %v685
    %v730 = vpack.c.b16 %v690, %v688
    %v731 = vpack.c.b16 %v691, %v689
    %v732 = vpack.c.b16 %v694, %v692
    %v733 = vpack.c.b16 %v695, %v693
    %v734 = vpack.c.b16 %v698, %v696
    %v735 = vpack.c.b16 %v699, %v697
    %v736 = vpack.c.b16 %v702, %v700
    %v737 = vpack.c.b16 %v703, %v701
    %v738 = vpack.c.b16 %v706, %v704
    %v739 = vpack.c.b16 %v707, %v705
    %772 = vmatprep.subr.bf16.mxu0 %v723
    %773 = vmatpush1.bf16.msra.mxu0 %v722
    %774 = vmatprep.subr.bf16.mxu0 %v721
    %775 = vmatpush1.bf16.msra.mxu0 %v720
    %776 = vmatprep.subr.bf16.mxu0 %v719
    %777 = vmatpush1.bf16.msra.mxu0 %v718
    %778 = vmatprep.subr.bf16.mxu0 %v717
    %779 = vmatpush1.bf16.msra.mxu0 %v716
    %780 = vmatprep.subr.bf16.mxu0 %v715
    %781 = vmatpush1.bf16.msra.mxu0 %v714
    %782 = vmatprep.subr.bf16.mxu0 %v713
    %783 = vmatpush1.bf16.msra.mxu0 %v712
    %784 = vmatprep.subr.bf16.mxu0 %v711
    %785 = vmatpush1.bf16.msra.mxu0 %v710
    %786 = vmatprep.subr.bf16.mxu0 %v709
    %787 = vmatpush1.bf16.msra.mxu0 %v708
    %788 = vmatprep.subr.bf16.mxu0 %v739
    %789 = vmatpush2.bf16.msra.mxu0 %v738
    %790 = vmatprep.subr.bf16.mxu0 %v737
    %791 = vmatpush2.bf16.msra.mxu0 %v736
    %792 = vmatprep.subr.bf16.mxu0 %v735
    %793 = vmatpush2.bf16.msra.mxu0 %v734
    %794 = vmatprep.subr.bf16.mxu0 %v733
    %795 = vmatpush2.bf16.msra.mxu0 %v732
    %796 = vmatprep.subr.bf16.mxu0 %v731
    %797 = vmatpush2.bf16.msra.mxu0 %v730
    %798 = vmatprep.subr.bf16.mxu0 %v729
    %799 = vmatpush2.bf16.msra.mxu0 %v728
    %800 = vmatprep.subr.bf16.mxu0 %v727
    %801 = vmatpush2.bf16.msra.mxu0 %v726
    %802 = vmatprep.subr.bf16.mxu0 %v725
    %803 = vmatpush2.bf16.msra.mxu0 %v724
    %804 = vmatprep.mubr.bf16.mxu0 %v575
    %805 = vmatmul.mubr.bf16.gmra.mxu0 %v579
    %v806 = vpop.f32.mrf.mxu0
    %v807 = vadd.f32 %v105, %v806
    %v808 = vpop.f32.mrf.mxu0
    %v809 = vadd.f32 %v109, %v808
    %v810 = vpop.f32.mrf.mxu0
    %v811 = vpop.f32.mrf.mxu0
    %812 = vdwg.mxu0
    %813 = vmax.xlane.f32.xlu0 %v809
    %v814 = vpop.xlane.xlu0 %813
    %v815 = vsub.f32 %v809, %v814
    %v816 = vmul.f32 %v815, 1.442695
    %v817 = vpow.pop %v816
    %818 = vadd.xlane.f32.xlu0 %v817
    %v819 = vpop.xlane.xlu0 %818
    %v820 = vlog2.pop %v819
    %v821 = vmul.f32 %v820, 0.6931472
    %v822 = vsub.f32 %v815, %v821
    %v823 = vpack.c.bf16 %v822, %v822
    %s824 = scalar_lea.vmem [#allocation9], 8
    %825 = vst [vmem:[%s824] sm:$0xf] %v823
    %v826 = vpack.c.bf16 %v807, %v807
    %s827 = scalar_lea.vmem [#allocation10], 8
    %828 = vst [vmem:[%s827] sm:$0xf] %v826
    %s829 = scalar_lea.vmem [#allocation3], 12
    %v830 = vld [vmem:[%s829] sm:$0xf]
    %v831 = vld [vmem:[#allocation8] sm:$0xff]
    %v832 = vld [vmem:[#allocation8 + $0x8] sm:$0xff]
    %v833 = vld [vmem:[#allocation8 + $0x10] sm:$0xff]
    %v834 = vld [vmem:[#allocation8 + $0x18] sm:$0xff]
    %v835 = vld [vmem:[#allocation8 + $0x20] sm:$0xff]
    %v836 = vld [vmem:[#allocation8 + $0x28] sm:$0xff]
    %v837 = vld [vmem:[#allocation8 + $0x30] sm:$0xff]
    %v838 = vld [vmem:[#allocation8 + $0x38] sm:$0xff]
    %v839 = vld [vmem:[#allocation8 + $0x40] sm:$0xff]
    %v840 = vld [vmem:[#allocation8 + $0x48] sm:$0xff]
    %v841 = vld [vmem:[#allocation8 + $0x50] sm:$0xff]
    %v842 = vld [vmem:[#allocation8 + $0x58] sm:$0xff]
    %v843 = vld [vmem:[#allocation8 + $0x60] sm:$0xff]
    %v844 = vld [vmem:[#allocation8 + $0x68] sm:$0xff]
    %v845 = vld [vmem:[#allocation8 + $0x70] sm:$0xff]
    %v846 = vld [vmem:[#allocation8 + $0x78] sm:$0xff]
    %v847 = vld [vmem:[#allocation8 + $0x80] sm:$0xff]
    %v848 = vld [vmem:[#allocation8 + $0x88] sm:$0xff]
    %v849 = vld [vmem:[#allocation8 + $0x90] sm:$0xff]
    %v850 = vld [vmem:[#allocation8 + $0x98] sm:$0xff]
    %v851 = vld [vmem:[#allocation8 + $0xa0] sm:$0xff]
    %v852 = vld [vmem:[#allocation8 + $0xa8] sm:$0xff]
    %v853 = vld [vmem:[#allocation8 + $0xb0] sm:$0xff]
    %v854 = vld [vmem:[#allocation8 + $0xb8] sm:$0xff]
    %v855 = vld [vmem:[#allocation8 + $0xc0] sm:$0xff]
    %v856 = vld [vmem:[#allocation8 + $0xc8] sm:$0xff]
    %v857 = vld [vmem:[#allocation8 + $0xd0] sm:$0xff]
    %v858 = vld [vmem:[#allocation8 + $0xd8] sm:$0xff]
    %v859 = vld [vmem:[#allocation8 + $0xe0] sm:$0xff]
    %v860 = vld [vmem:[#allocation8 + $0xe8] sm:$0xff]
    %v861 = vld [vmem:[#allocation8 + $0xf0] sm:$0xff]
    %v862 = vld [vmem:[#allocation8 + $0xf8] sm:$0xff]
    %v895 = vunpack.c.l.b16 %v831
    %v896 = vunpack.c.h.b16 %v831
    %v897 = vunpack.c.l.b16 %v832
    %v898 = vunpack.c.h.b16 %v832
    %v899 = vunpack.c.l.b16 %v833
    %v900 = vunpack.c.h.b16 %v833
    %v901 = vunpack.c.l.b16 %v834
    %v902 = vunpack.c.h.b16 %v834
    %v903 = vunpack.c.l.b16 %v835
    %v904 = vunpack.c.h.b16 %v835
    %v905 = vunpack.c.l.b16 %v836
    %v906 = vunpack.c.h.b16 %v836
    %v907 = vunpack.c.l.b16 %v837
    %v908 = vunpack.c.h.b16 %v837
    %v909 = vunpack.c.l.b16 %v838
    %v910 = vunpack.c.h.b16 %v838
    %v911 = vunpack.c.l.b16 %v839
    %v912 = vunpack.c.h.b16 %v839
    %v913 = vunpack.c.l.b16 %v840
    %v914 = vunpack.c.h.b16 %v840
    %v915 = vunpack.c.l.b16 %v841
    %v916 = vunpack.c.h.b16 %v841
    %v917 = vunpack.c.l.b16 %v842
    %v918 = vunpack.c.h.b16 %v842
    %v919 = vunpack.c.l.b16 %v843
    %v920 = vunpack.c.h.b16 %v843
    %v921 = vunpack.c.l.b16 %v844
    %v922 = vunpack.c.h.b16 %v844
    %v923 = vunpack.c.l.b16 %v845
    %v924 = vunpack.c.h.b16 %v845
    %v925 = vunpack.c.l.b16 %v846
    %v926 = vunpack.c.h.b16 %v846
    %v927 = vunpack.c.l.b16 %v847
    %v928 = vunpack.c.h.b16 %v847
    %v929 = vunpack.c.l.b16 %v848
    %v930 = vunpack.c.h.b16 %v848
    %v931 = vunpack.c.l.b16 %v849
    %v932 = vunpack.c.h.b16 %v849
    %v933 = vunpack.c.l.b16 %v850
    %v934 = vunpack.c.h.b16 %v850
    %v935 = vunpack.c.l.b16 %v851
    %v936 = vunpack.c.h.b16 %v851
    %v937 = vunpack.c.l.b16 %v852
    %v938 = vunpack.c.h.b16 %v852
    %v939 = vunpack.c.l.b16 %v853
    %v940 = vunpack.c.h.b16 %v853
    %v941 = vunpack.c.l.b16 %v854
    %v942 = vunpack.c.h.b16 %v854
    %v943 = vunpack.c.l.b16 %v855
    %v944 = vunpack.c.h.b16 %v855
    %v945 = vunpack.c.l.b16 %v856
    %v946 = vunpack.c.h.b16 %v856
    %v947 = vunpack.c.l.b16 %v857
    %v948 = vunpack.c.h.b16 %v857
    %v949 = vunpack.c.l.b16 %v858
    %v950 = vunpack.c.h.b16 %v858
    %v951 = vunpack.c.l.b16 %v859
    %v952 = vunpack.c.h.b16 %v859
    %v953 = vunpack.c.l.b16 %v860
    %v954 = vunpack.c.h.b16 %v860
    %v955 = vunpack.c.l.b16 %v861
    %v956 = vunpack.c.h.b16 %v861
    %v957 = vunpack.c.l.b16 %v862
    %v958 = vunpack.c.h.b16 %v862
    %v959 = vpack.c.b16 %v897, %v895
    %v960 = vpack.c.b16 %v898, %v896
    %v961 = vpack.c.b16 %v901, %v899
    %v962 = vpack.c.b16 %v902, %v900
    %v963 = vpack.c.b16 %v905, %v903
    %v964 = vpack.c.b16 %v906, %v904
    %v965 = vpack.c.b16 %v909, %v907
    %v966 = vpack.c.b16 %v910, %v908
    %v967 = vpack.c.b16 %v913, %v911
    %v968 = vpack.c.b16 %v914, %v912
    %v969 = vpack.c.b16 %v917, %v915
    %v970 = vpack.c.b16 %v918, %v916
    %v971 = vpack.c.b16 %v921, %v919
    %v972 = vpack.c.b16 %v922, %v920
    %v973 = vpack.c.b16 %v925, %v923
    %v974 = vpack.c.b16 %v926, %v924
    %v975 = vpack.c.b16 %v929, %v927
    %v976 = vpack.c.b16 %v930, %v928
    %v977 = vpack.c.b16 %v933, %v931
    %v978 = vpack.c.b16 %v934, %v932
    %v979 = vpack.c.b16 %v937, %v935
    %v980 = vpack.c.b16 %v938, %v936
    %v981 = vpack.c.b16 %v941, %v939
    %v982 = vpack.c.b16 %v942, %v940
    %v983 = vpack.c.b16 %v945, %v943
    %v984 = vpack.c.b16 %v946, %v944
    %v985 = vpack.c.b16 %v949, %v947
    %v986 = vpack.c.b16 %v950, %v948
    %v987 = vpack.c.b16 %v953, %v951
    %v988 = vpack.c.b16 %v954, %v952
    %v989 = vpack.c.b16 %v957, %v955
    %v990 = vpack.c.b16 %v958, %v956
    %1023 = vmatprep.subr.bf16.mxu0 %v974
    %1024 = vmatpush1.bf16.msra.mxu0 %v973
    %1025 = vmatprep.subr.bf16.mxu0 %v972
    %1026 = vmatpush1.bf16.msra.mxu0 %v971
    %1027 = vmatprep.subr.bf16.mxu0 %v970
    %1028 = vmatpush1.bf16.msra.mxu0 %v969
    %1029 = vmatprep.subr.bf16.mxu0 %v968
    %1030 = vmatpush1.bf16.msra.mxu0 %v967
    %1031 = vmatprep.subr.bf16.mxu0 %v966
    %1032 = vmatpush1.bf16.msra.mxu0 %v965
    %1033 = vmatprep.subr.bf16.mxu0 %v964
    %1034 = vmatpush1.bf16.msra.mxu0 %v963
    %1035 = vmatprep.subr.bf16.mxu0 %v962
    %1036 = vmatpush1.bf16.msra.mxu0 %v961
    %1037 = vmatprep.subr.bf16.mxu0 %v960
    %1038 = vmatpush1.bf16.msra.mxu0 %v959
    %1039 = vmatprep.subr.bf16.mxu0 %v990
    %1040 = vmatpush2.bf16.msra.mxu0 %v989
    %1041 = vmatprep.subr.bf16.mxu0 %v988
    %1042 = vmatpush2.bf16.msra.mxu0 %v987
    %1043 = vmatprep.subr.bf16.mxu0 %v986
    %1044 = vmatpush2.bf16.msra.mxu0 %v985
    %1045 = vmatprep.subr.bf16.mxu0 %v984
    %1046 = vmatpush2.bf16.msra.mxu0 %v983
    %1047 = vmatprep.subr.bf16.mxu0 %v982
    %1048 = vmatpush2.bf16.msra.mxu0 %v981
    %1049 = vmatprep.subr.bf16.mxu0 %v980
    %1050 = vmatpush2.bf16.msra.mxu0 %v979
    %1051 = vmatprep.subr.bf16.mxu0 %v978
    %1052 = vmatpush2.bf16.msra.mxu0 %v977
    %1053 = vmatprep.subr.bf16.mxu0 %v976
    %1054 = vmatpush2.bf16.msra.mxu0 %v975
    %1055 = vmatprep.mubr.bf16.mxu0 %v826
    %1056 = vmatmul.mubr.bf16.gmra.mxu0 %v830
    %v1057 = vpop.f32.mrf.mxu0
    %v1058 = vadd.f32 %v105, %v1057
    %v1059 = vpop.f32.mrf.mxu0
    %v1060 = vadd.f32 %v109, %v1059
    %v1061 = vpop.f32.mrf.mxu0
    %v1062 = vpop.f32.mrf.mxu0
    %1063 = vdwg.mxu0
    %1064 = vmax.xlane.f32.xlu0 %v1060
    %v1065 = vpop.xlane.xlu0 %1064
    %v1066 = vsub.f32 %v1060, %v1065
    %v1067 = vmul.f32 %v1066, 1.442695
    %v1068 = vpow.pop %v1067
    %1069 = vadd.xlane.f32.xlu0 %v1068
    %v1070 = vpop.xlane.xlu0 %1069
    %v1071 = vlog2.pop %v1070
    %v1072 = vmul.f32 %v1071, 0.6931472
    %v1073 = vsub.f32 %v1066, %v1072
    %v1074 = vpack.c.bf16 %v1073, %v1073
    %s1075 = scalar_lea.vmem [#allocation9], 12
    %1076 = vst [vmem:[%s1075] sm:$0xf] %v1074
    %v1077 = vpack.c.bf16 %v1058, %v1058
    %s1078 = scalar_lea.vmem [#allocation10], 12
    %1079 = vst [vmem:[%s1078] sm:$0xf] %v1077
    %s1080 = scalar_lea.vmem [#allocation3], 16
    %v1081 = vld [vmem:[%s1080] sm:$0xf]
    %v1082 = vld [vmem:[#allocation8] sm:$0xff]
    %v1083 = vld [vmem:[#allocation8 + $0x8] sm:$0xff]
    %v1084 = vld [vmem:[#allocation8 + $0x10] sm:$0xff]
    %v1085 = vld [vmem:[#allocation8 + $0x18] sm:$0xff]
    %v1086 = vld [vmem:[#allocation8 + $0x20] sm:$0xff]
    %v1087 = vld [vmem:[#allocation8 + $0x28] sm:$0xff]
    %v1088 = vld [vmem:[#allocation8 + $0x30] sm:$0xff]
    %v1089 = vld [vmem:[#allocation8 + $0x38] sm:$0xff]
    %v1090 = vld [vmem:[#allocation8 + $0x40] sm:$0xff]
    %v1091 = vld [vmem:[#allocation8 + $0x48] sm:$0xff]
    %v1092 = vld [vmem:[#allocation8 + $0x50] sm:$0xff]
    %v1093 = vld [vmem:[#allocation8 + $0x58] sm:$0xff]
    %v1094 = vld [vmem:[#allocation8 + $0x60] sm:$0xff]
    %v1095 = vld [vmem:[#allocation8 + $0x68] sm:$0xff]
    %v1096 = vld [vmem:[#allocation8 + $0x70] sm:$0xff]
    %v1097 = vld [vmem:[#allocation8 + $0x78] sm:$0xff]
    %v1098 = vld [vmem:[#allocation8 + $0x80] sm:$0xff]
    %v1099 = vld [vmem:[#allocation8 + $0x88] sm:$0xff]
    %v1100 = vld [vmem:[#allocation8 + $0x90] sm:$0xff]
    %v1101 = vld [vmem:[#allocation8 + $0x98] sm:$0xff]
    %v1102 = vld [vmem:[#allocation8 + $0xa0] sm:$0xff]
    %v1103 = vld [vmem:[#allocation8 + $0xa8] sm:$0xff]
    %v1104 = vld [vmem:[#allocation8 + $0xb0] sm:$0xff]
    %v1105 = vld [vmem:[#allocation8 + $0xb8] sm:$0xff]
    %v1106 = vld [vmem:[#allocation8 + $0xc0] sm:$0xff]
    %v1107 = vld [vmem:[#allocation8 + $0xc8] sm:$0xff]
    %v1108 = vld [vmem:[#allocation8 + $0xd0] sm:$0xff]
    %v1109 = vld [vmem:[#allocation8 + $0xd8] sm:$0xff]
    %v1110 = vld [vmem:[#allocation8 + $0xe0] sm:$0xff]
    %v1111 = vld [vmem:[#allocation8 + $0xe8] sm:$0xff]
    %v1112 = vld [vmem:[#allocation8 + $0xf0] sm:$0xff]
    %v1113 = vld [vmem:[#allocation8 + $0xf8] sm:$0xff]
    %v1146 = vunpack.c.l.b16 %v1082
    %v1147 = vunpack.c.h.b16 %v1082
    %v1148 = vunpack.c.l.b16 %v1083
    %v1149 = vunpack.c.h.b16 %v1083
    %v1150 = vunpack.c.l.b16 %v1084
    %v1151 = vunpack.c.h.b16 %v1084
    %v1152 = vunpack.c.l.b16 %v1085
    %v1153 = vunpack.c.h.b16 %v1085
    %v1154 = vunpack.c.l.b16 %v1086
    %v1155 = vunpack.c.h.b16 %v1086
    %v1156 = vunpack.c.l.b16 %v1087
    %v1157 = vunpack.c.h.b16 %v1087
    %v1158 = vunpack.c.l.b16 %v1088
    %v1159 = vunpack.c.h.b16 %v1088
    %v1160 = vunpack.c.l.b16 %v1089
    %v1161 = vunpack.c.h.b16 %v1089
    %v1162 = vunpack.c.l.b16 %v1090
    %v1163 = vunpack.c.h.b16 %v1090
    %v1164 = vunpack.c.l.b16 %v1091
    %v1165 = vunpack.c.h.b16 %v1091
    %v1166 = vunpack.c.l.b16 %v1092
    %v1167 = vunpack.c.h.b16 %v1092
    %v1168 = vunpack.c.l.b16 %v1093
    %v1169 = vunpack.c.h.b16 %v1093
    %v1170 = vunpack.c.l.b16 %v1094
    %v1171 = vunpack.c.h.b16 %v1094
    %v1172 = vunpack.c.l.b16 %v1095
    %v1173 = vunpack.c.h.b16 %v1095
    %v1174 = vunpack.c.l.b16 %v1096
    %v1175 = vunpack.c.h.b16 %v1096
    %v1176 = vunpack.c.l.b16 %v1097
    %v1177 = vunpack.c.h.b16 %v1097
    %v1178 = vunpack.c.l.b16 %v1098
    %v1179 = vunpack.c.h.b16 %v1098
    %v1180 = vunpack.c.l.b16 %v1099
    %v1181 = vunpack.c.h.b16 %v1099
    %v1182 = vunpack.c.l.b16 %v1100
    %v1183 = vunpack.c.h.b16 %v1100
    %v1184 = vunpack.c.l.b16 %v1101
    %v1185 = vunpack.c.h.b16 %v1101
    %v1186 = vunpack.c.l.b16 %v1102
    %v1187 = vunpack.c.h.b16 %v1102
    %v1188 = vunpack.c.l.b16 %v1103
    %v1189 = vunpack.c.h.b16 %v1103
    %v1190 = vunpack.c.l.b16 %v1104
    %v1191 = vunpack.c.h.b16 %v1104
    %v1192 = vunpack.c.l.b16 %v1105
    %v1193 = vunpack.c.h.b16 %v1105
    %v1194 = vunpack.c.l.b16 %v1106
    %v1195 = vunpack.c.h.b16 %v1106
    %v1196 = vunpack.c.l.b16 %v1107
    %v1197 = vunpack.c.h.b16 %v1107
    %v1198 = vunpack.c.l.b16 %v1108
    %v1199 = vunpack.c.h.b16 %v1108
    %v1200 = vunpack.c.l.b16 %v1109
    %v1201 = vunpack.c.h.b16 %v1109
    %v1202 = vunpack.c.l.b16 %v1110
    %v1203 = vunpack.c.h.b16 %v1110
    %v1204 = vunpack.c.l.b16 %v1111
    %v1205 = vunpack.c.h.b16 %v1111
    %v1206 = vunpack.c.l.b16 %v1112
    %v1207 = vunpack.c.h.b16 %v1112
    %v1208 = vunpack.c.l.b16 %v1113
    %v1209 = vunpack.c.h.b16 %v1113
    %v1210 = vpack.c.b16 %v1148, %v1146
    %v1211 = vpack.c.b16 %v1149, %v1147
    %v1212 = vpack.c.b16 %v1152, %v1150
    %v1213 = vpack.c.b16 %v1153, %v1151
    %v1214 = vpack.c.b16 %v1156, %v1154
    %v1215 = vpack.c.b16 %v1157, %v1155
    %v1216 = vpack.c.b16 %v1160, %v1158
    %v1217 = vpack.c.b16 %v1161, %v1159
    %v1218 = vpack.c.b16 %v1164, %v1162
    %v1219 = vpack.c.b16 %v1165, %v1163
    %v1220 = vpack.c.b16 %v1168, %v1166
    %v1221 = vpack.c.b16 %v1169, %v1167
    %v1222 = vpack.c.b16 %v1172, %v1170
    %v1223 = vpack.c.b16 %v1173, %v1171
    %v1224 = vpack.c.b16 %v1176, %v1174
    %v1225 = vpack.c.b16 %v1177, %v1175
    %v1226 = vpack.c.b16 %v1180, %v1178
    %v1227 = vpack.c.b16 %v1181, %v1179
    %v1228 = vpack.c.b16 %v1184, %v1182
    %v1229 = vpack.c.b16 %v1185, %v1183
    %v1230 = vpack.c.b16 %v1188, %v1186
    %v1231 = vpack.c.b16 %v1189, %v1187
    %v1232 = vpack.c.b16 %v1192, %v1190
    %v1233 = vpack.c.b16 %v1193, %v1191
    %v1234 = vpack.c.b16 %v1196, %v1194
    %v1235 = vpack.c.b16 %v1197, %v1195
    %v1236 = vpack.c.b16 %v1200, %v1198
    %v1237 = vpack.c.b16 %v1201, %v1199
    %v1238 = vpack.c.b16 %v1204, %v1202
    %v1239 = vpack.c.b16 %v1205, %v1203
    %v1240 = vpack.c.b16 %v1208, %v1206
    %v1241 = vpack.c.b16 %v1209, %v1207
    %1274 = vmatprep.subr.bf16.mxu0 %v1225
    %1275 = vmatpush1.bf16.msra.mxu0 %v1224
    %1276 = vmatprep.subr.bf16.mxu0 %v1223
    %1277 = vmatpush1.bf16.msra.mxu0 %v1222
    %1278 = vmatprep.subr.bf16.mxu0 %v1221
    %1279 = vmatpush1.bf16.msra.mxu0 %v1220
    %1280 = vmatprep.subr.bf16.mxu0 %v1219
    %1281 = vmatpush1.bf16.msra.mxu0 %v1218
    %1282 = vmatprep.subr.bf16.mxu0 %v1217
    %1283 = vmatpush1.bf16.msra.mxu0 %v1216
    %1284 = vmatprep.subr.bf16.mxu0 %v1215
    %1285 = vmatpush1.bf16.msra.mxu0 %v1214
    %1286 = vmatprep.subr.bf16.mxu0 %v1213
    %1287 = vmatpush1.bf16.msra.mxu0 %v1212
    %1288 = vmatprep.subr.bf16.mxu0 %v1211
    %1289 = vmatpush1.bf16.msra.mxu0 %v1210
    %1290 = vmatprep.subr.bf16.mxu0 %v1241
    %1291 = vmatpush2.bf16.msra.mxu0 %v1240
    %1292 = vmatprep.subr.bf16.mxu0 %v1239
    %1293 = vmatpush2.bf16.msra.mxu0 %v1238
    %1294 = vmatprep.subr.bf16.mxu0 %v1237
    %1295 = vmatpush2.bf16.msra.mxu0 %v1236
    %1296 = vmatprep.subr.bf16.mxu0 %v1235
    %1297 = vmatpush2.bf16.msra.mxu0 %v1234
    %1298 = vmatprep.subr.bf16.mxu0 %v1233
    %1299 = vmatpush2.bf16.msra.mxu0 %v1232
    %1300 = vmatprep.subr.bf16.mxu0 %v1231
    %1301 = vmatpush2.bf16.msra.mxu0 %v1230
    %1302 = vmatprep.subr.bf16.mxu0 %v1229
    %1303 = vmatpush2.bf16.msra.mxu0 %v1228
    %1304 = vmatprep.subr.bf16.mxu0 %v1227
    %1305 = vmatpush2.bf16.msra.mxu0 %v1226
    %1306 = vmatprep.mubr.bf16.mxu0 %v1077
    %1307 = vmatmul.mubr.bf16.gmra.mxu0 %v1081
    %v1308 = vpop.f32.mrf.mxu0
    %v1309 = vadd.f32 %v105, %v1308
    %v1310 = vpop.f32.mrf.mxu0
    %v1311 = vadd.f32 %v109, %v1310
    %v1312 = vpop.f32.mrf.mxu0
    %v1313 = vpop.f32.mrf.mxu0
    %1314 = vdwg.mxu0
    %1315 = vmax.xlane.f32.xlu0 %v1311
    %v1316 = vpop.xlane.xlu0 %1315
    %v1317 = vsub.f32 %v1311, %v1316
    %v1318 = vmul.f32 %v1317, 1.442695
    %v1319 = vpow.pop %v1318
    %1320 = vadd.xlane.f32.xlu0 %v1319
    %v1321 = vpop.xlane.xlu0 %1320
    %v1322 = vlog2.pop %v1321
    %v1323 = vmul.f32 %v1322, 0.6931472
    %v1324 = vsub.f32 %v1317, %v1323
    %v1325 = vpack.c.bf16 %v1324, %v1324
    %s1326 = scalar_lea.vmem [#allocation9], 16
    %1327 = vst [vmem:[%s1326] sm:$0xf] %v1325
    %v1328 = vpack.c.bf16 %v1309, %v1309
    %s1329 = scalar_lea.vmem [#allocation10], 16
    %1330 = vst [vmem:[%s1329] sm:$0xf] %v1328
    %s1331 = scalar_lea.vmem [#allocation3], 20
    %v1332 = vld [vmem:[%s1331] sm:$0xf]
    %v1333 = vld [vmem:[#allocation8] sm:$0xff]
    %v1334 = vld [vmem:[#allocation8 + $0x8] sm:$0xff]
    %v1335 = vld [vmem:[#allocation8 + $0x10] sm:$0xff]
    %v1336 = vld [vmem:[#allocation8 + $0x18] sm:$0xff]
    %v1337 = vld [vmem:[#allocation8 + $0x20] sm:$0xff]
    %v1338 = vld [vmem:[#allocation8 + $0x28] sm:$0xff]
    %v1339 = vld [vmem:[#allocation8 + $0x30] sm:$0xff]
    %v1340 = vld [vmem:[#allocation8 + $0x38] sm:$0xff]
    %v1341 = vld [vmem:[#allocation8 + $0x40] sm:$0xff]
    %v1342 = vld [vmem:[#allocation8 + $0x48] sm:$0xff]
    %v1343 = vld [vmem:[#allocation8 + $0x50] sm:$0xff]
    %v1344 = vld [vmem:[#allocation8 + $0x58] sm:$0xff]
    %v1345 = vld [vmem:[#allocation8 + $0x60] sm:$0xff]
    %v1346 = vld [vmem:[#allocation8 + $0x68] sm:$0xff]
    %v1347 = vld [vmem:[#allocation8 + $0x70] sm:$0xff]
    %v1348 = vld [vmem:[#allocation8 + $0x78] sm:$0xff]
    %v1349 = vld [vmem:[#allocation8 + $0x80] sm:$0xff]
    %v1350 = vld [vmem:[#allocation8 + $0x88] sm:$0xff]
    %v1351 = vld [vmem:[#allocation8 + $0x90] sm:$0xff]
    %v1352 = vld [vmem:[#allocation8 + $0x98] sm:$0xff]
    %v1353 = vld [vmem:[#allocation8 + $0xa0] sm:$0xff]
    %v1354 = vld [vmem:[#allocation8 + $0xa8] sm:$0xff]
    %v1355 = vld [vmem:[#allocation8 + $0xb0] sm:$0xff]
    %v1356 = vld [vmem:[#allocation8 + $0xb8] sm:$0xff]
    %v1357 = vld [vmem:[#allocation8 + $0xc0] sm:$0xff]
    %v1358 = vld [vmem:[#allocation8 + $0xc8] sm:$0xff]
    %v1359 = vld [vmem:[#allocation8 + $0xd0] sm:$0xff]
    %v1360 = vld [vmem:[#allocation8 + $0xd8] sm:$0xff]
    %v1361 = vld [vmem:[#allocation8 + $0xe0] sm:$0xff]
    %v1362 = vld [vmem:[#allocation8 + $0xe8] sm:$0xff]
    %v1363 = vld [vmem:[#allocation8 + $0xf0] sm:$0xff]
    %v1364 = vld [vmem:[#allocation8 + $0xf8] sm:$0xff]
    %v1397 = vunpack.c.l.b16 %v1333
    %v1398 = vunpack.c.h.b16 %v1333
    %v1399 = vunpack.c.l.b16 %v1334
    %v1400 = vunpack.c.h.b16 %v1334
    %v1401 = vunpack.c.l.b16 %v1335
    %v1402 = vunpack.c.h.b16 %v1335
    %v1403 = vunpack.c.l.b16 %v1336
    %v1404 = vunpack.c.h.b16 %v1336
    %v1405 = vunpack.c.l.b16 %v1337
    %v1406 = vunpack.c.h.b16 %v1337
    %v1407 = vunpack.c.l.b16 %v1338
    %v1408 = vunpack.c.h.b16 %v1338
    %v1409 = vunpack.c.l.b16 %v1339
    %v1410 = vunpack.c.h.b16 %v1339
    %v1411 = vunpack.c.l.b16 %v1340
    %v1412 = vunpack.c.h.b16 %v1340
    %v1413 = vunpack.c.l.b16 %v1341
    %v1414 = vunpack.c.h.b16 %v1341
    %v1415 = vunpack.c.l.b16 %v1342
    %v1416 = vunpack.c.h.b16 %v1342
    %v1417 = vunpack.c.l.b16 %v1343
    %v1418 = vunpack.c.h.b16 %v1343
    %v1419 = vunpack.c.l.b16 %v1344
    %v1420 = vunpack.c.h.b16 %v1344
    %v1421 = vunpack.c.l.b16 %v1345
    %v1422 = vunpack.c.h.b16 %v1345
    %v1423 = vunpack.c.l.b16 %v1346
    %v1424 = vunpack.c.h.b16 %v1346
    %v1425 = vunpack.c.l.b16 %v1347
    %v1426 = vunpack.c.h.b16 %v1347
    %v1427 = vunpack.c.l.b16 %v1348
    %v1428 = vunpack.c.h.b16 %v1348
    %v1429 = vunpack.c.l.b16 %v1349
    %v1430 = vunpack.c.h.b16 %v1349
    %v1431 = vunpack.c.l.b16 %v1350
    %v1432 = vunpack.c.h.b16 %v1350
    %v1433 = vunpack.c.l.b16 %v1351
    %v1434 = vunpack.c.h.b16 %v1351
    %v1435 = vunpack.c.l.b16 %v1352
    %v1436 = vunpack.c.h.b16 %v1352
    %v1437 = vunpack.c.l.b16 %v1353
    %v1438 = vunpack.c.h.b16 %v1353
    %v1439 = vunpack.c.l.b16 %v1354
    %v1440 = vunpack.c.h.b16 %v1354
    %v1441 = vunpack.c.l.b16 %v1355
    %v1442 = vunpack.c.h.b16 %v1355
    %v1443 = vunpack.c.l.b16 %v1356
    %v1444 = vunpack.c.h.b16 %v1356
    %v1445 = vunpack.c.l.b16 %v1357
    %v1446 = vunpack.c.h.b16 %v1357
    %v1447 = vunpack.c.l.b16 %v1358
    %v1448 = vunpack.c.h.b16 %v1358
    %v1449 = vunpack.c.l.b16 %v1359
    %v1450 = vunpack.c.h.b16 %v1359
    %v1451 = vunpack.c.l.b16 %v1360
    %v1452 = vunpack.c.h.b16 %v1360
    %v1453 = vunpack.c.l.b16 %v1361
    %v1454 = vunpack.c.h.b16 %v1361
    %v1455 = vunpack.c.l.b16 %v1362
    %v1456 = vunpack.c.h.b16 %v1362
    %v1457 = vunpack.c.l.b16 %v1363
    %v1458 = vunpack.c.h.b16 %v1363
    %v1459 = vunpack.c.l.b16 %v1364
    %v1460 = vunpack.c.h.b16 %v1364
    %v1461 = vpack.c.b16 %v1399, %v1397
    %v1462 = vpack.c.b16 %v1400, %v1398
    %v1463 = vpack.c.b16 %v1403, %v1401
    %v1464 = vpack.c.b16 %v1404, %v1402
    %v1465 = vpack.c.b16 %v1407, %v1405
    %v1466 = vpack.c.b16 %v1408, %v1406
    %v1467 = vpack.c.b16 %v1411, %v1409
    %v1468 = vpack.c.b16 %v1412, %v1410
    %v1469 = vpack.c.b16 %v1415, %v1413
    %v1470 = vpack.c.b16 %v1416, %v1414
    %v1471 = vpack.c.b16 %v1419, %v1417
    %v1472 = vpack.c.b16 %v1420, %v1418
    %v1473 = vpack.c.b16 %v1423, %v1421
    %v1474 = vpack.c.b16 %v1424, %v1422
    %v1475 = vpack.c.b16 %v1427, %v1425
    %v1476 = vpack.c.b16 %v1428, %v1426
    %v1477 = vpack.c.b16 %v1431, %v1429
    %v1478 = vpack.c.b16 %v1432, %v1430
    %v1479 = vpack.c.b16 %v1435, %v1433
    %v1480 = vpack.c.b16 %v1436, %v1434
    %v1481 = vpack.c.b16 %v1439, %v1437
    %v1482 = vpack.c.b16 %v1440, %v1438
    %v1483 = vpack.c.b16 %v1443, %v1441
    %v1484 = vpack.c.b16 %v1444, %v1442
    %v1485 = vpack.c.b16 %v1447, %v1445
    %v1486 = vpack.c.b16 %v1448, %v1446
    %v1487 = vpack.c.b16 %v1451, %v1449
    %v1488 = vpack.c.b16 %v1452, %v1450
    %v1489 = vpack.c.b16 %v1455, %v1453
    %v1490 = vpack.c.b16 %v1456, %v1454
    %v1491 = vpack.c.b16 %v1459, %v1457
    %v1492 = vpack.c.b16 %v1460, %v1458
    %1525 = vmatprep.subr.bf16.mxu0 %v1476
    %1526 = vmatpush1.bf16.msra.mxu0 %v1475
    %1527 = vmatprep.subr.bf16.mxu0 %v1474
    %1528 = vmatpush1.bf16.msra.mxu0 %v1473
    %1529 = vmatprep.subr.bf16.mxu0 %v1472
    %1530 = vmatpush1.bf16.msra.mxu0 %v1471
    %1531 = vmatprep.subr.bf16.mxu0 %v1470
    %1532 = vmatpush1.bf16.msra.mxu0 %v1469
    %1533 = vmatprep.subr.bf16.mxu0 %v1468
    %1534 = vmatpush1.bf16.msra.mxu0 %v1467
    %1535 = vmatprep.subr.bf16.mxu0 %v1466
    %1536 = vmatpush1.bf16.msra.mxu0 %v1465
    %1537 = vmatprep.subr.bf16.mxu0 %v1464
    %1538 = vmatpush1.bf16.msra.mxu0 %v1463
    %1539 = vmatprep.subr.bf16.mxu0 %v1462
    %1540 = vmatpush1.bf16.msra.mxu0 %v1461
    %1541 = vmatprep.subr.bf16.mxu0 %v1492
    %1542 = vmatpush2.bf16.msra.mxu0 %v1491
    %1543 = vmatprep.subr.bf16.mxu0 %v1490
    %1544 = vmatpush2.bf16.msra.mxu0 %v1489
    %1545 = vmatprep.subr.bf16.mxu0 %v1488
    %1546 = vmatpush2.bf16.msra.mxu0 %v1487
    %1547 = vmatprep.subr.bf16.mxu0 %v1486
    %1548 = vmatpush2.bf16.msra.mxu0 %v1485
    %1549 = vmatprep.subr.bf16.mxu0 %v1484
    %1550 = vmatpush2.bf16.msra.mxu0 %v1483
    %1551 = vmatprep.subr.bf16.mxu0 %v1482
    %1552 = vmatpush2.bf16.msra.mxu0 %v1481
    %1553 = vmatprep.subr.bf16.mxu0 %v1480
    %1554 = vmatpush2.bf16.msra.mxu0 %v1479
    %1555 = vmatprep.subr.bf16.mxu0 %v1478
    %1556 = vmatpush2.bf16.msra.mxu0 %v1477
    %1557 = vmatprep.mubr.bf16.mxu0 %v1328
    %1558 = vmatmul.mubr.bf16.gmra.mxu0 %v1332
    %v1559 = vpop.f32.mrf.mxu0
    %v1560 = vadd.f32 %v105, %v1559
    %v1561 = vpop.f32.mrf.mxu0
    %v1562 = vadd.f32 %v109, %v1561
    %v1563 = vpop.f32.mrf.mxu0
    %v1564 = vpop.f32.mrf.mxu0
    %1565 = vdwg.mxu0
    %1566 = vmax.xlane.f32.xlu0 %v1562
    %v1567 = vpop.xlane.xlu0 %1566
    %v1568 = vsub.f32 %v1562, %v1567
    %v1569 = vmul.f32 %v1568, 1.442695
    %v1570 = vpow.pop %v1569
    %1571 = vadd.xlane.f32.xlu0 %v1570
    %v1572 = vpop.xlane.xlu0 %1571
    %v1573 = vlog2.pop %v1572
    %v1574 = vmul.f32 %v1573, 0.6931472
    %v1575 = vsub.f32 %v1568, %v1574
    %v1576 = vpack.c.bf16 %v1575, %v1575
    %s1577 = scalar_lea.vmem [#allocation9], 20
    %1578 = vst [vmem:[%s1577] sm:$0xf] %v1576
    %v1579 = vpack.c.bf16 %v1560, %v1560
    %s1580 = scalar_lea.vmem [#allocation10], 20
    %1581 = vst [vmem:[%s1580] sm:$0xf] %v1579
    %s1582 = scalar_lea.vmem [#allocation3], 24
    %v1583 = vld [vmem:[%s1582] sm:$0xf]
    %v1584 = vld [vmem:[#allocation8] sm:$0xff]
    %v1585 = vld [vmem:[#allocation8 + $0x8] sm:$0xff]
    %v1586 = vld [vmem:[#allocation8 + $0x10] sm:$0xff]
    %v1587 = vld [vmem:[#allocation8 + $0x18] sm:$0xff]
    %v1588 = vld [vmem:[#allocation8 + $0x20] sm:$0xff]
    %v1589 = vld [vmem:[#allocation8 + $0x28] sm:$0xff]
    %v1590 = vld [vmem:[#allocation8 + $0x30] sm:$0xff]
    %v1591 = vld [vmem:[#allocation8 + $0x38] sm:$0xff]
    %v1592 = vld [vmem:[#allocation8 + $0x40] sm:$0xff]
    %v1593 = vld [vmem:[#allocation8 + $0x48] sm:$0xff]
    %v1594 = vld [vmem:[#allocation8 + $0x50] sm:$0xff]
    %v1595 = vld [vmem:[#allocation8 + $0x58] sm:$0xff]
    %v1596 = vld [vmem:[#allocation8 + $0x60] sm:$0xff]
    %v1597 = vld [vmem:[#allocation8 + $0x68] sm:$0xff]
    %v1598 = vld [vmem:[#allocation8 + $0x70] sm:$0xff]
    %v1599 = vld [vmem:[#allocation8 + $0x78] sm:$0xff]
    %v1600 = vld [vmem:[#allocation8 + $0x80] sm:$0xff]
    %v1601 = vld [vmem:[#allocation8 + $0x88] sm:$0xff]
    %v1602 = vld [vmem:[#allocation8 + $0x90] sm:$0xff]
    %v1603 = vld [vmem:[#allocation8 + $0x98] sm:$0xff]
    %v1604 = vld [vmem:[#allocation8 + $0xa0] sm:$0xff]
    %v1605 = vld [vmem:[#allocation8 + $0xa8] sm:$0xff]
    %v1606 = vld [vmem:[#allocation8 + $0xb0] sm:$0xff]
    %v1607 = vld [vmem:[#allocation8 + $0xb8] sm:$0xff]
    %v1608 = vld [vmem:[#allocation8 + $0xc0] sm:$0xff]
    %v1609 = vld [vmem:[#allocation8 + $0xc8] sm:$0xff]
    %v1610 = vld [vmem:[#allocation8 + $0xd0] sm:$0xff]
    %v1611 = vld [vmem:[#allocation8 + $0xd8] sm:$0xff]
    %v1612 = vld [vmem:[#allocation8 + $0xe0] sm:$0xff]
    %v1613 = vld [vmem:[#allocation8 + $0xe8] sm:$0xff]
    %v1614 = vld [vmem:[#allocation8 + $0xf0] sm:$0xff]
    %v1615 = vld [vmem:[#allocation8 + $0xf8] sm:$0xff]
    %v1648 = vunpack.c.l.b16 %v1584
    %v1649 = vunpack.c.h.b16 %v1584
    %v1650 = vunpack.c.l.b16 %v1585
    %v1651 = vunpack.c.h.b16 %v1585
    %v1652 = vunpack.c.l.b16 %v1586
    %v1653 = vunpack.c.h.b16 %v1586
    %v1654 = vunpack.c.l.b16 %v1587
    %v1655 = vunpack.c.h.b16 %v1587
    %v1656 = vunpack.c.l.b16 %v1588
    %v1657 = vunpack.c.h.b16 %v1588
    %v1658 = vunpack.c.l.b16 %v1589
    %v1659 = vunpack.c.h.b16 %v1589
    %v1660 = vunpack.c.l.b16 %v1590
    %v1661 = vunpack.c.h.b16 %v1590
    %v1662 = vunpack.c.l.b16 %v1591
    %v1663 = vunpack.c.h.b16 %v1591
    %v1664 = vunpack.c.l.b16 %v1592
    %v1665 = vunpack.c.h.b16 %v1592
    %v1666 = vunpack.c.l.b16 %v1593
    %v1667 = vunpack.c.h.b16 %v1593
    %v1668 = vunpack.c.l.b16 %v1594
    %v1669 = vunpack.c.h.b16 %v1594
    %v1670 = vunpack.c.l.b16 %v1595
    %v1671 = vunpack.c.h.b16 %v1595
    %v1672 = vunpack.c.l.b16 %v1596
    %v1673 = vunpack.c.h.b16 %v1596
    %v1674 = vunpack.c.l.b16 %v1597
    %v1675 = vunpack.c.h.b16 %v1597
    %v1676 = vunpack.c.l.b16 %v1598
    %v1677 = vunpack.c.h.b16 %v1598
    %v1678 = vunpack.c.l.b16 %v1599
    %v1679 = vunpack.c.h.b16 %v1599
    %v1680 = vunpack.c.l.b16 %v1600
    %v1681 = vunpack.c.h.b16 %v1600
    %v1682 = vunpack.c.l.b16 %v1601
    %v1683 = vunpack.c.h.b16 %v1601
    %v1684 = vunpack.c.l.b16 %v1602
    %v1685 = vunpack.c.h.b16 %v1602
    %v1686 = vunpack.c.l.b16 %v1603
    %v1687 = vunpack.c.h.b16 %v1603
    %v1688 = vunpack.c.l.b16 %v1604
    %v1689 = vunpack.c.h.b16 %v1604
    %v1690 = vunpack.c.l.b16 %v1605
    %v1691 = vunpack.c.h.b16 %v1605
    %v1692 = vunpack.c.l.b16 %v1606
    %v1693 = vunpack.c.h.b16 %v1606
    %v1694 = vunpack.c.l.b16 %v1607
    %v1695 = vunpack.c.h.b16 %v1607
    %v1696 = vunpack.c.l.b16 %v1608
    %v1697 = vunpack.c.h.b16 %v1608
    %v1698 = vunpack.c.l.b16 %v1609
    %v1699 = vunpack.c.h.b16 %v1609
    %v1700 = vunpack.c.l.b16 %v1610
    %v1701 = vunpack.c.h.b16 %v1610
    %v1702 = vunpack.c.l.b16 %v1611
    %v1703 = vunpack.c.h.b16 %v1611
    %v1704 = vunpack.c.l.b16 %v1612
    %v1705 = vunpack.c.h.b16 %v1612
    %v1706 = vunpack.c.l.b16 %v1613
    %v1707 = vunpack.c.h.b16 %v1613
    %v1708 = vunpack.c.l.b16 %v1614
    %v1709 = vunpack.c.h.b16 %v1614
    %v1710 = vunpack.c.l.b16 %v1615
    %v1711 = vunpack.c.h.b16 %v1615
    %v1712 = vpack.c.b16 %v1650, %v1648
    %v1713 = vpack.c.b16 %v1651, %v1649
    %v1714 = vpack.c.b16 %v1654, %v1652
    %v1715 = vpack.c.b16 %v1655, %v1653
    %v1716 = vpack.c.b16 %v1658, %v1656
    %v1717 = vpack.c.b16 %v1659, %v1657
    %v1718 = vpack.c.b16 %v1662, %v1660
    %v1719 = vpack.c.b16 %v1663, %v1661
    %v1720 = vpack.c.b16 %v1666, %v1664
    %v1721 = vpack.c.b16 %v1667, %v1665
    %v1722 = vpack.c.b16 %v1670, %v1668
    %v1723 = vpack.c.b16 %v1671, %v1669
    %v1724 = vpack.c.b16 %v1674, %v1672
    %v1725 = vpack.c.b16 %v1675, %v1673
    %v1726 = vpack.c.b16 %v1678, %v1676
    %v1727 = vpack.c.b16 %v1679, %v1677
    %v1728 = vpack.c.b16 %v1682, %v1680
    %v1729 = vpack.c.b16 %v1683, %v1681
    %v1730 = vpack.c.b16 %v1686, %v1684
    %v1731 = vpack.c.b16 %v1687, %v1685
    %v1732 = vpack.c.b16 %v1690, %v1688
    %v1733 = vpack.c.b16 %v1691, %v1689
    %v1734 = vpack.c.b16 %v1694, %v1692
    %v1735 = vpack.c.b16 %v1695, %v1693
    %v1736 = vpack.c.b16 %v1698, %v1696
    %v1737 = vpack.c.b16 %v1699, %v1697
    %v1738 = vpack.c.b16 %v1702, %v1700
    %v1739 = vpack.c.b16 %v1703, %v1701
    %v1740 = vpack.c.b16 %v1706, %v1704
    %v1741 = vpack.c.b16 %v1707, %v1705
    %v1742 = vpack.c.b16 %v1710, %v1708
    %v1743 = vpack.c.b16 %v1711, %v1709
    %1776 = vmatprep.subr.bf16.mxu0 %v1727
    %1777 = vmatpush1.bf16.msra.mxu0 %v1726
    %1778 = vmatprep.subr.bf16.mxu0 %v1725
    %1779 = vmatpush1.bf16.msra.mxu0 %v1724
    %1780 = vmatprep.subr.bf16.mxu0 %v1723
    %1781 = vmatpush1.bf16.msra.mxu0 %v1722
    %1782 = vmatprep.subr.bf16.mxu0 %v1721
    %1783 = vmatpush1.bf16.msra.mxu0 %v1720
    %1784 = vmatprep.subr.bf16.mxu0 %v1719
    %1785 = vmatpush1.bf16.msra.mxu0 %v1718
    %1786 = vmatprep.subr.bf16.mxu0 %v1717
    %1787 = vmatpush1.bf16.msra.mxu0 %v1716
    %1788 = vmatprep.subr.bf16.mxu0 %v1715
    %1789 = vmatpush1.bf16.msra.mxu0 %v1714
    %1790 = vmatprep.subr.bf16.mxu0 %v1713
    %1791 = vmatpush1.bf16.msra.mxu0 %v1712
    %1792 = vmatprep.subr.bf16.mxu0 %v1743
    %1793 = vmatpush2.bf16.msra.mxu0 %v1742
    %1794 = vmatprep.subr.bf16.mxu0 %v1741
    %1795 = vmatpush2.bf16.msra.mxu0 %v1740
    %1796 = vmatprep.subr.bf16.mxu0 %v1739
    %1797 = vmatpush2.bf16.msra.mxu0 %v1738
    %1798 = vmatprep.subr.bf16.mxu0 %v1737
    %1799 = vmatpush2.bf16.msra.mxu0 %v1736
    %1800 = vmatprep.subr.bf16.mxu0 %v1735
    %1801 = vmatpush2.bf16.msra.mxu0 %v1734
    %1802 = vmatprep.subr.bf16.mxu0 %v1733
    %1803 = vmatpush2.bf16.msra.mxu0 %v1732
    %1804 = vmatprep.subr.bf16.mxu0 %v1731
    %1805 = vmatpush2.bf16.msra.mxu0 %v1730
    %1806 = vmatprep.subr.bf16.mxu0 %v1729
    %1807 = vmatpush2.bf16.msra.mxu0 %v1728
    %1808 = vmatprep.mubr.bf16.mxu0 %v1579
    %1809 = vmatmul.mubr.bf16.gmra.mxu0 %v1583
    %v1810 = vpop.f32.mrf.mxu0
    %v1811 = vadd.f32 %v105, %v1810
    %v1812 = vpop.f32.mrf.mxu0
    %v1813 = vadd.f32 %v109, %v1812
    %v1814 = vpop.f32.mrf.mxu0
    %v1815 = vpop.f32.mrf.mxu0
    %1816 = vdwg.mxu0
    %1817 = vmax.xlane.f32.xlu0 %v1813
    %v1818 = vpop.xlane.xlu0 %1817
    %v1819 = vsub.f32 %v1813, %v1818
    %v1820 = vmul.f32 %v1819, 1.442695
    %v1821 = vpow.pop %v1820
    %1822 = vadd.xlane.f32.xlu0 %v1821
    %v1823 = vpop.xlane.xlu0 %1822
    %v1824 = vlog2.pop %v1823
    %v1825 = vmul.f32 %v1824, 0.6931472
    %v1826 = vsub.f32 %v1819, %v1825
    %v1827 = vpack.c.bf16 %v1826, %v1826
    %s1828 = scalar_lea.vmem [#allocation9], 24
    %1829 = vst [vmem:[%s1828] sm:$0xf] %v1827
    %v1830 = vpack.c.bf16 %v1811, %v1811
    %s1831 = scalar_lea.vmem [#allocation10], 24
    %1832 = vst [vmem:[%s1831] sm:$0xf] %v1830
    %s1833 = scalar_lea.vmem [#allocation3], 28
    %v1834 = vld [vmem:[%s1833] sm:$0xf]
    %v1835 = vld [vmem:[#allocation8] sm:$0xff]
    %v1836 = vld [vmem:[#allocation8 + $0x8] sm:$0xff]
    %v1837 = vld [vmem:[#allocation8 + $0x10] sm:$0xff]
    %v1838 = vld [vmem:[#allocation8 + $0x18] sm:$0xff]
    %v1839 = vld [vmem:[#allocation8 + $0x20] sm:$0xff]
    %v1840 = vld [vmem:[#allocation8 + $0x28] sm:$0xff]
    %v1841 = vld [vmem:[#allocation8 + $0x30] sm:$0xff]
    %v1842 = vld [vmem:[#allocation8 + $0x38] sm:$0xff]
    %v1843 = vld [vmem:[#allocation8 + $0x40] sm:$0xff]
    %v1844 = vld [vmem:[#allocation8 + $0x48] sm:$0xff]
    %v1845 = vld [vmem:[#allocation8 + $0x50] sm:$0xff]
    %v1846 = vld [vmem:[#allocation8 + $0x58] sm:$0xff]
    %v1847 = vld [vmem:[#allocation8 + $0x60] sm:$0xff]
    %v1848 = vld [vmem:[#allocation8 + $0x68] sm:$0xff]
    %v1849 = vld [vmem:[#allocation8 + $0x70] sm:$0xff]
    %v1850 = vld [vmem:[#allocation8 + $0x78] sm:$0xff]
    %v1851 = vld [vmem:[#allocation8 + $0x80] sm:$0xff]
    %v1852 = vld [vmem:[#allocation8 + $0x88] sm:$0xff]
    %v1853 = vld [vmem:[#allocation8 + $0x90] sm:$0xff]
    %v1854 = vld [vmem:[#allocation8 + $0x98] sm:$0xff]
    %v1855 = vld [vmem:[#allocation8 + $0xa0] sm:$0xff]
    %v1856 = vld [vmem:[#allocation8 + $0xa8] sm:$0xff]
    %v1857 = vld [vmem:[#allocation8 + $0xb0] sm:$0xff]
    %v1858 = vld [vmem:[#allocation8 + $0xb8] sm:$0xff]
    %v1859 = vld [vmem:[#allocation8 + $0xc0] sm:$0xff]
    %v1860 = vld [vmem:[#allocation8 + $0xc8] sm:$0xff]
    %v1861 = vld [vmem:[#allocation8 + $0xd0] sm:$0xff]
    %v1862 = vld [vmem:[#allocation8 + $0xd8] sm:$0xff]
    %v1863 = vld [vmem:[#allocation8 + $0xe0] sm:$0xff]
    %v1864 = vld [vmem:[#allocation8 + $0xe8] sm:$0xff]
    %v1865 = vld [vmem:[#allocation8 + $0xf0] sm:$0xff]
    %v1866 = vld [vmem:[#allocation8 + $0xf8] sm:$0xff]
    %v1899 = vunpack.c.l.b16 %v1835
    %v1900 = vunpack.c.h.b16 %v1835
    %v1901 = vunpack.c.l.b16 %v1836
    %v1902 = vunpack.c.h.b16 %v1836
    %v1903 = vunpack.c.l.b16 %v1837
    %v1904 = vunpack.c.h.b16 %v1837
    %v1905 = vunpack.c.l.b16 %v1838
    %v1906 = vunpack.c.h.b16 %v1838
    %v1907 = vunpack.c.l.b16 %v1839
    %v1908 = vunpack.c.h.b16 %v1839
    %v1909 = vunpack.c.l.b16 %v1840
    %v1910 = vunpack.c.h.b16 %v1840
    %v1911 = vunpack.c.l.b16 %v1841
    %v1912 = vunpack.c.h.b16 %v1841
    %v1913 = vunpack.c.l.b16 %v1842
    %v1914 = vunpack.c.h.b16 %v1842
    %v1915 = vunpack.c.l.b16 %v1843
    %v1916 = vunpack.c.h.b16 %v1843
    %v1917 = vunpack.c.l.b16 %v1844
    %v1918 = vunpack.c.h.b16 %v1844
    %v1919 = vunpack.c.l.b16 %v1845
    %v1920 = vunpack.c.h.b16 %v1845
    %v1921 = vunpack.c.l.b16 %v1846
    %v1922 = vunpack.c.h.b16 %v1846
    %v1923 = vunpack.c.l.b16 %v1847
    %v1924 = vunpack.c.h.b16 %v1847
    %v1925 = vunpack.c.l.b16 %v1848
    %v1926 = vunpack.c.h.b16 %v1848
    %v1927 = vunpack.c.l.b16 %v1849
    %v1928 = vunpack.c.h.b16 %v1849
    %v1929 = vunpack.c.l.b16 %v1850
    %v1930 = vunpack.c.h.b16 %v1850
    %v1931 = vunpack.c.l.b16 %v1851
    %v1932 = vunpack.c.h.b16 %v1851
    %v1933 = vunpack.c.l.b16 %v1852
    %v1934 = vunpack.c.h.b16 %v1852
    %v1935 = vunpack.c.l.b16 %v1853
    %v1936 = vunpack.c.h.b16 %v1853
    %v1937 = vunpack.c.l.b16 %v1854
    %v1938 = vunpack.c.h.b16 %v1854
    %v1939 = vunpack.c.l.b16 %v1855
    %v1940 = vunpack.c.h.b16 %v1855
    %v1941 = vunpack.c.l.b16 %v1856
    %v1942 = vunpack.c.h.b16 %v1856
    %v1943 = vunpack.c.l.b16 %v1857
    %v1944 = vunpack.c.h.b16 %v1857
    %v1945 = vunpack.c.l.b16 %v1858
    %v1946 = vunpack.c.h.b16 %v1858
    %v1947 = vunpack.c.l.b16 %v1859
    %v1948 = vunpack.c.h.b16 %v1859
    %v1949 = vunpack.c.l.b16 %v1860
    %v1950 = vunpack.c.h.b16 %v1860
    %v1951 = vunpack.c.l.b16 %v1861
    %v1952 = vunpack.c.h.b16 %v1861
    %v1953 = vunpack.c.l.b16 %v1862
    %v1954 = vunpack.c.h.b16 %v1862
    %v1955 = vunpack.c.l.b16 %v1863
    %v1956 = vunpack.c.h.b16 %v1863
    %v1957 = vunpack.c.l.b16 %v1864
    %v1958 = vunpack.c.h.b16 %v1864
    %v1959 = vunpack.c.l.b16 %v1865
    %v1960 = vunpack.c.h.b16 %v1865
    %v1961 = vunpack.c.l.b16 %v1866
    %v1962 = vunpack.c.h.b16 %v1866
    %v1963 = vpack.c.b16 %v1901, %v1899
    %v1964 = vpack.c.b16 %v1902, %v1900
    %v1965 = vpack.c.b16 %v1905, %v1903
    %v1966 = vpack.c.b16 %v1906, %v1904
    %v1967 = vpack.c.b16 %v1909, %v1907
    %v1968 = vpack.c.b16 %v1910, %v1908
    %v1969 = vpack.c.b16 %v1913, %v1911
    %v1970 = vpack.c.b16 %v1914, %v1912
    %v1971 = vpack.c.b16 %v1917, %v1915
    %v1972 = vpack.c.b16 %v1918, %v1916
    %v1973 = vpack.c.b16 %v1921, %v1919
    %v1974 = vpack.c.b16 %v1922, %v1920
    %v1975 = vpack.c.b16 %v1925, %v1923
    %v1976 = vpack.c.b16 %v1926, %v1924
    %v1977 = vpack.c.b16 %v1929, %v1927
    %v1978 = vpack.c.b16 %v1930, %v1928
    %v1979 = vpack.c.b16 %v1933, %v1931
    %v1980 = vpack.c.b16 %v1934, %v1932
    %v1981 = vpack.c.b16 %v1937, %v1935
    %v1982 = vpack.c.b16 %v1938, %v1936
    %v1983 = vpack.c.b16 %v1941, %v1939
    %v1984 = vpack.c.b16 %v1942, %v1940
    %v1985 = vpack.c.b16 %v1945, %v1943
    %v1986 = vpack.c.b16 %v1946, %v1944
    %v1987 = vpack.c.b16 %v1949, %v1947
    %v1988 = vpack.c.b16 %v1950, %v1948
    %v1989 = vpack.c.b16 %v1953, %v1951
    %v1990 = vpack.c.b16 %v1954, %v1952
    %v1991 = vpack.c.b16 %v1957, %v1955
    %v1992 = vpack.c.b16 %v1958, %v1956
    %v1993 = vpack.c.b16 %v1961, %v1959
    %v1994 = vpack.c.b16 %v1962, %v1960
    %2027 = vmatprep.subr.bf16.mxu0 %v1978
    %2028 = vmatpush1.bf16.msra.mxu0 %v1977
    %2029 = vmatprep.subr.bf16.mxu0 %v1976
    %2030 = vmatpush1.bf16.msra.mxu0 %v1975
    %2031 = vmatprep.subr.bf16.mxu0 %v1974
    %2032 = vmatpush1.bf16.msra.mxu0 %v1973
    %2033 = vmatprep.subr.bf16.mxu0 %v1972
    %2034 = vmatpush1.bf16.msra.mxu0 %v1971
    %2035 = vmatprep.subr.bf16.mxu0 %v1970
    %2036 = vmatpush1.bf16.msra.mxu0 %v1969
    %2037 = vmatprep.subr.bf16.mxu0 %v1968
    %2038 = vmatpush1.bf16.msra.mxu0 %v1967
    %2039 = vmatprep.subr.bf16.mxu0 %v1966
    %2040 = vmatpush1.bf16.msra.mxu0 %v1965
    %2041 = vmatprep.subr.bf16.mxu0 %v1964
    %2042 = vmatpush1.bf16.msra.mxu0 %v1963
    %2043 = vmatprep.subr.bf16.mxu0 %v1994
    %2044 = vmatpush2.bf16.msra.mxu0 %v1993
    %2045 = vmatprep.subr.bf16.mxu0 %v1992
    %2046 = vmatpush2.bf16.msra.mxu0 %v1991
    %2047 = vmatprep.subr.bf16.mxu0 %v1990
    %2048 = vmatpush2.bf16.msra.mxu0 %v1989
    %2049 = vmatprep.subr.bf16.mxu0 %v1988
    %2050 = vmatpush2.bf16.msra.mxu0 %v1987
    %2051 = vmatprep.subr.bf16.mxu0 %v1986
    %2052 = vmatpush2.bf16.msra.mxu0 %v1985
    %2053 = vmatprep.subr.bf16.mxu0 %v1984
    %2054 = vmatpush2.bf16.msra.mxu0 %v1983
    %2055 = vmatprep.subr.bf16.mxu0 %v1982
    %2056 = vmatpush2.bf16.msra.mxu0 %v1981
    %2057 = vmatprep.subr.bf16.mxu0 %v1980
    %2058 = vmatpush2.bf16.msra.mxu0 %v1979
    %2059 = vmatprep.mubr.bf16.mxu0 %v1830
    %2060 = vmatmul.mubr.bf16.gmra.mxu0 %v1834
    %v2061 = vpop.f32.mrf.mxu0
    %v2062 = vadd.f32 %v105, %v2061
    %v2063 = vpop.f32.mrf.mxu0
    %v2064 = vadd.f32 %v109, %v2063
    %v2065 = vpop.f32.mrf.mxu0
    %v2066 = vpop.f32.mrf.mxu0
    %2067 = vdwg.mxu0
    %2068 = vmax.xlane.f32.xlu0 %v2064
    %v2069 = vpop.xlane.xlu0 %2068
    %v2070 = vsub.f32 %v2064, %v2069
    %v2071 = vmul.f32 %v2070, 1.442695
    %v2072 = vpow.pop %v2071
    %2073 = vadd.xlane.f32.xlu0 %v2072
    %v2074 = vpop.xlane.xlu0 %2073
    %v2075 = vlog2.pop %v2074
    %v2076 = vmul.f32 %v2075, 0.6931472
    %v2077 = vsub.f32 %v2070, %v2076
    %v2078 = vpack.c.bf16 %v2077, %v2077
    %s2079 = scalar_lea.vmem [#allocation9], 28
    %2080 = vst [vmem:[%s2079] sm:$0xf] %v2078
    %v2081 = vpack.c.bf16 %v2062, %v2062
    %s2082 = scalar_lea.vmem [#allocation10], 28
    %2083 = vst [vmem:[%s2082] sm:$0xf] %v2081
    %2084 = vst [vmem:[#allocation2] sm:$0xf] %v2081
    // Predicated region
    $region34: #{tpu_custom_call.1} parent=1 // pred_check
      _
    $region35: #{tpu_custom_call.1} parent=1 // pred_check_branch
      %2086 = sbr.rel (0) target = $region37
    $region36: #{tpu_custom_call.1} parent=1 // pred_region
      %s2088 = ssub.s32 512, 512
      %2089 = vsyncadd [#allocation5], %s2088
      %s2090 = sshll.u32 [#allocation9], 4
      %s2091 = int_to_ptr.vmem [resolvable:$true] %s2090
      %2096 = dma.vmem_to_hbm [thread:$0]  %s2091, 512, %s4, [#allocation5], 64, 64, 4
    $region37: #{tpu_custom_call.1} parent=1 // pred_fallthru
      _
    // Predicated region
    $region38: #{tpu_custom_call.1} parent=1 // pred_check
      _
    $region39: #{tpu_custom_call.1} parent=1 // pred_check_branch
      %2098 = sbr.rel (0) target = $region41
    $region40: #{tpu_custom_call.1} parent=1 // pred_region
      %s2100 = ssub.s32 512, 512
      %2101 = vsyncadd [#allocation11], %s2100
      %s2102 = sshll.u32 [#allocation10], 4
      %s2103 = int_to_ptr.vmem [resolvable:$true] %s2102
      %2108 = dma.vmem_to_hbm [thread:$0]  %s2103, 512, %s5, [#allocation11], 64, 64, 4
    $region41: #{tpu_custom_call.1} parent=1 // pred_fallthru
      _
    // Predicated region
    $region42: #{tpu_custom_call.1} parent=1 // pred_check
      _
    $region43: #{tpu_custom_call.1} parent=1 // pred_check_branch
      %2110 = sbr.rel (0) target = $region45
    $region44: #{tpu_custom_call.1} parent=1 // pred_region
      %2111 = dma.done [#allocation5], 512
    $region45: #{tpu_custom_call.1} parent=1 // pred_fallthru
      _
    // Predicated region
    $region46: #{tpu_custom_call.1} parent=1 // pred_check
      _
    $region47: #{tpu_custom_call.1} parent=1 // pred_check_branch
      %2113 = sbr.rel (0) target = $region49
    $region48: #{tpu_custom_call.1} parent=1 // pred_region
      %2114 = dma.done [#allocation11], 512
    $region49: #{tpu_custom_call.1} parent=1 // pred_fallthru
      _
    %2115 = vsyncpa [#allocation4], 1
    %2116 = vsyncpa [#allocation7], 1
    %2117 = vsyncpa [#allocation5], 1
    %2118 = vsyncpa [#allocation11], 1

</llo_original>
